<compile_context>
chip_gen: v5e
topology: v5e:2x2
jax: 0.10.0
libtpu: 0.0.40
codegen_flags: <defaults>
</compile_context>

<pallas_src>
import functools

import jax
import jax.numpy as jnp
from jax.experimental import pallas as pl
from jax.experimental.pallas import tpu as pltpu

LN_EPS = 1e-5   # torch.nn.LayerNorm default
LANES = 128


def _round_up(x, m):
    return ((x + m - 1) // m) * m


def _layernorm(x, gamma, beta):
    mu = jnp.mean(x, axis=-1, keepdims=True)
    var = jnp.mean((x - mu) ** 2, axis=-1, keepdims=True)
    return (x - mu) * jax.lax.rsqrt(var + LN_EPS) * gamma + beta


def _vmem_limit_bytes():
    try:
        cap = int(getattr(pltpu.get_tpu_info(), "vmem_capacity_bytes",
                          128 * 1024 * 1024))
    except Exception:
        cap = 128 * 1024 * 1024
    # ~3/4 of physical VMEM, capped: ~48 MiB on v7x (64 MiB), ~96 MiB on v5e/v6e.
    return min((cap * 3) // 4, 112 * 1024 * 1024)


# ---------------------------------------------------------------------------
# Fused decoder kernel body. grid = (batch, vocab_tile)
# ---------------------------------------------------------------------------
def _decoder_kernel(x0_ref, preg_ref, preb_ref, wv_ref, wg_ref, bv_ref, bg_ref,
                    lng_ref, lnb_ref, outg_ref, outb_ref, outw_ref, outlb_ref,
                    o_ref, pad_sc, h_sc, *, layers, window, seq, halo):
    pad = window // 2
    E = x0_ref.shape[-1]

    # The conv stack depends only on the batch index: run it at vocab tile 0 and
    # keep the final hidden state resident in h_sc for the remaining vocab tiles.
    @pl.when(pl.program_id(1) == 0)
    def _compute_hidden():
        # Zero only the halo rows (interior stores below never touch them, so
        # they stay zero across all layers of this batch step).
        pad_sc[pl.ds(0, halo), :] = jnp.zeros((halo, E), jnp.bfloat16)
        pad_sc[pl.ds(halo + seq, halo), :] = jnp.zeros((halo, E), jnp.bfloat16)

        # pre_deconv LayerNorm (latent linear + reshape + positions were folded
        # into the x0 input wrapper-side; dropout is identity in eval mode).
        x = _layernorm(x0_ref[0], preg_ref[...], preb_ref[...])        # f32 (S, E)

        # CNN stack: residual/LN activation stays f32; a bf16 copy in the padded
        # scratch (interior at a 16-row aligned offset) feeds the MXU taps.
        for l in range(layers):                                         # static unroll
            pad_sc[pl.ds(halo, seq), :] = x.astype(jnp.bfloat16)        # aligned store
            acc_v = None
            acc_g = None
            for k in range(window):                                     # per-tap matmuls
                tap = pad_sc[pl.ds(halo - pad + k, seq), :]             # bf16 (S, E)
                pv = jnp.dot(tap, wv_ref[l, k], preferred_element_type=jnp.float32)
                pg = jnp.dot(tap, wg_ref[l, k], preferred_element_type=jnp.float32)
                acc_v = pv if acc_v is None else acc_v + pv
                acc_g = pg if acc_g is None else acc_g + pg
            glu = (acc_v + bv_ref[l]) * jax.nn.sigmoid(acc_g + bg_ref[l])
            # NOTE: the PyTorch line `cnn_output = output * output_mask...` is dead
            # (immediately overwritten) -> no masking inside the loop.
            x = _layernorm(glu + x, lng_ref[l], lnb_ref[l])

        # output_proj LayerNorm; keep the hidden resident for all vocab tiles.
        h_sc[...] = _layernorm(x, outg_ref[...], outb_ref[...]).astype(jnp.bfloat16)

    # output_proj Linear, tiled over the lane-padded vocab axis (lane-dense stores).
    o_ref[0] = (jnp.dot(h_sc[...], outw_ref[...],
                        preferred_element_type=jnp.float32) + outlb_ref[...])


# ---------------------------------------------------------------------------
# Forward pass wrapper: weight re-layout + tiny latent projection in plain XLA
# ---------------------------------------------------------------------------
def conv_decoder_forward(params, latent_words, mask, *, shrink_factor, layers,
                         window, embedding_dim, max_len=1000):
    assert window % 2 == 1, (
        "PyTorch Conv1d(padding=window//2) is only shape-preserving for odd window")
    B, L, LV = latent_words.shape
    E = embedding_dim
    R = 2 * shrink_factor
    S = L * R
    if S > max_len:
        raise ValueError("Too long input.")
    f32, bf16 = jnp.float32, jnp.bfloat16

    output_mask = jnp.repeat(mask[:, :, None], R, axis=2).reshape(B, -1)

    # Latent linear + reshape + position add are a tiny (L*LV*R*E) op: do them in
    # plain XLA and hand the kernel the real (B, S, E) activation.  This removes the
    # R^2 block-diagonal inflation of the kernel input DMA / wasted MXU K work.
    emb = latent_words @ params["lat_w"] + params["lat_b"]            # (B, L, R*E)
    x0 = (emb.reshape(B, S, E) + params["pos"][:, :S]).astype(f32)    # (B, S, E)

    # Conv1d weights (layers, W, E, 2E) -> per-tap value/gate halves (layers, W, E, E).
    cw = params["conv_w"]
    wv = cw[..., :E].astype(bf16)
    wg = cw[..., E:].astype(bf16)
    bv = params["conv_b"][..., :E].astype(f32)                        # (layers, 1, E)
    bg = params["conv_b"][..., E:].astype(f32)

    # Output projection: lane-padded vocab, tiled over the second grid axis.
    V1 = params["out_w"].shape[1]
    TN = min(512, _round_up(V1, LANES))
    Vp = _round_up(V1, TN)
    NV = Vp // TN
    outw = jnp.zeros((E, Vp), f32).at[:, :V1].set(params["out_w"]).astype(bf16)
    outlb = jnp.zeros((1, Vp), f32).at[:, :V1].set(params["out_lb"])

    pad = window // 2
    halo = max(16, _round_up(pad, 16))   # bf16 sublane-tile aligned interior offset

    consts = [params["pre_g"], params["pre_b"], wv, wg, bv, bg,
              params["ln_g"], params["ln_b"], params["out_g"], params["out_b"]]
    # Grid-invariant weights: whole-array VMEM residents -> single-buffered.
    vmem_resident = pl.BlockSpec(memory_space=pltpu.MemorySpace.VMEM)

    kernel = functools.partial(_decoder_kernel, layers=layers, window=window,
                               seq=S, halo=halo)
    logits_p = pl.pallas_call(
        kernel,
        grid=(B, NV),
        in_specs=([pl.BlockSpec((1, S, E), lambda b, v: (b, 0, 0))]
                  + [vmem_resident] * len(consts)
                  + [pl.BlockSpec((E, TN), lambda b, v: (0, v)),
                     pl.BlockSpec((1, TN), lambda b, v: (0, v))]),
        out_specs=pl.BlockSpec((1, S, TN), lambda b, v: (b, 0, v)),
        out_shape=jax.ShapeDtypeStruct((B, S, Vp), f32),
        scratch_shapes=[pltpu.VMEM((halo + S + halo, E), bf16),   # padded conv scratch
                        pltpu.VMEM((S, E), bf16)],                # hidden for proj
        compiler_params=pltpu.CompilerParams(
            dimension_semantics=("parallel", "arbitrary"),
            vmem_limit_bytes=_vmem_limit_bytes()),
    )(x0, *consts, outw, outlb)

    return logits_p[:, :, :V1], output_mask


# ---------------------------------------------------------------------------
# Pure-JAX f32 reference (PyTorch-faithful math)
# ---------------------------------------------------------------------------
def reference_forward(params, latent_words, mask, *, shrink_factor, layers,
                      window, embedding_dim):
    B, L, _ = latent_words.shape
    E = embedding_dim
    output_mask = jnp.repeat(mask[:, :, None], 2 * shrink_factor,
                             axis=2).reshape(B, -1)
    emb = latent_words @ params["lat_w"] + params["lat_b"]
    S = L * 2 * shrink_factor
    x = emb.reshape(B, S, E) + params["pos"][:, :S]
    x = _layernorm(x, params["pre_g"], params["pre_b"])
    pad = window // 2
    for i in range(layers):
        xp = jnp.pad(x, ((0, 0), (pad, pad), (0, 0)))
        acc = jnp.zeros((B, S, 2 * E), jnp.float32) + params["conv_b"][i]
        for k in range(window):
            acc = acc + jnp.einsum("bse,ef->bsf", xp[:, k:k + S],
                                   params["conv_w"][i][k])
        glu = acc[..., :E] * jax.nn.sigmoid(acc[..., E:])
        x = _layernorm(glu + x, params["ln_g"][i], params["ln_b"][i])
    h = _layernorm(x, params["out_g"], params["out_b"])
    logits = h @ params["out_w"] + params["out_lb"]
    return logits, output_mask


# ---------------------------------------------------------------------------
# Deterministic parameter init (shapes per ConvDecoder.__init__)
# ---------------------------------------------------------------------------
def init_params(key, *, embedding_dim, vocab_size, latent_vocab_size,
                shrink_factor, layers, window, max_len):
    E = embedding_dim
    D2 = 2 * shrink_factor * E
    k = jax.random.split(key, 8)
    f32 = jnp.float32
    p = {}
    p["lat_w"] = 0.05 * jax.random.normal(k[0], (latent_vocab_size, D2), f32)
    p["lat_b"] = 0.01 * jax.random.normal(k[1], (1, D2), f32)
    p["pos"] = jax.random.normal(k[2], (1, max_len, E), f32)          # randn
    p["pre_g"] = jnp.ones((1, E), f32)
    p["pre_b"] = jnp.zeros((1, E), f32)
    # Conv1d weights (2E, E, W) pre-transposed to (W, E, 2E), stacked over layers
    p["conv_w"] = 0.05 * jax.random.normal(k[3], (layers, window, E, 2 * E), f32)
    p["conv_b"] = 0.01 * jax.random.normal(k[4], (layers, 1, 2 * E), f32)
    p["ln_g"] = jnp.ones((layers, 1, E), f32)
    p["ln_b"] = jnp.zeros((layers, 1, E), f32)
    p["out_g"] = jnp.ones((1, E), f32)
    p["out_b"] = jnp.zeros((1, E), f32)
    p["out_w"] = 0.05 * jax.random.normal(k[5], (E, vocab_size + 1), f32)
    p["out_lb"] = 0.01 * jax.random.normal(k[6], (1, vocab_size + 1), f32)
    return p


if __name__ == "__main__":
    # Small shapes consistent with the module.
    B, L = 2, 4
    embedding_dim = 32
    vocab_size = 11          # -> logits dim 12
    latent_vocab_size = 16
    shrink_factor = 2        # -> seq S = L * 2 * shrink = 16
    layers = 3
    window = 3
    max_len = 64

    key = jax.random.PRNGKey(0)
    kp, kx, km = jax.random.split(key, 3)
    params = init_params(kp, embedding_dim=embedding_dim,
                         vocab_size=vocab_size,
                         latent_vocab_size=latent_vocab_size,
                         shrink_factor=shrink_factor, layers=layers,
                         window=window, max_len=max_len)

    latent_words = jax.random.normal(kx, (B, L, latent_vocab_size), jnp.float32)
    mask = (jax.random.uniform(km, (B, L)) > 0.3).astype(jnp.float32)

    hp = dict(shrink_factor=shrink_factor, layers=layers, window=window,
              embedding_dim=embedding_dim)

    logits, output_mask = conv_decoder_forward(params, latent_words, mask,
                                               max_len=max_len, **hp)
    jax.block_until_ready((logits, output_mask))

    ref_logits, ref_mask = reference_forward(params, latent_words, mask, **hp)
    assert logits.shape == (B, L * 2 * shrink_factor, vocab_size + 1)
    assert output_mask.shape == (B, L * 2 * shrink_factor)
    assert jnp.allclose(output_mask, ref_mask)
    # tolerance accounts for bf16 MXU operands (accumulation is f32)
    assert jnp.allclose(logits, ref_logits, atol=1e-2, rtol=1e-2), (
        float(jnp.max(jnp.abs(logits - ref_logits))))

    print("KERNEL_OK")
</pallas_src>

<mosaic_0001>
module attributes {stable_mosaic.version = 11 : i64} {
  func.func @_decoder_kernel(%arg0: i32, %arg1: i32, %arg2: memref<1x16x32xf32, #tpu.memory_space<vmem>>, %arg3: memref<1x32xf32, #tpu.memory_space<vmem>>, %arg4: memref<1x32xf32, #tpu.memory_space<vmem>>, %arg5: memref<3x3x32x32xbf16, #tpu.memory_space<vmem>>, %arg6: memref<3x3x32x32xbf16, #tpu.memory_space<vmem>>, %arg7: memref<3x1x32xf32, #tpu.memory_space<vmem>>, %arg8: memref<3x1x32xf32, #tpu.memory_space<vmem>>, %arg9: memref<3x1x32xf32, #tpu.memory_space<vmem>>, %arg10: memref<3x1x32xf32, #tpu.memory_space<vmem>>, %arg11: memref<1x32xf32, #tpu.memory_space<vmem>>, %arg12: memref<1x32xf32, #tpu.memory_space<vmem>>, %arg13: memref<32x128xbf16, #tpu.memory_space<vmem>>, %arg14: memref<1x128xf32, #tpu.memory_space<vmem>>, %arg15: memref<1x16x128xf32, #tpu.memory_space<vmem>>, %arg16: memref<48x32xbf16, #tpu.memory_space<vmem>>, %arg17: memref<16x32xbf16, #tpu.memory_space<vmem>>) attributes {dimension_semantics = [#tpu.dimension_semantics<parallel>, #tpu.dimension_semantics<arbitrary>], iteration_bounds = array<i64: 2, 1>, scalar_prefetch = 0 : i64, scratch_operands = 2 : i64, tpu.core_type = #tpu.core_type<tc>, window_params = [{transform_indices = @transform_0, window_bounds = array<i64: 1, 16, 32>}, {pipeline_mode = #tpu.pipeline_mode<synchronous>, transform_indices = @transform_1, window_bounds = array<i64: 1, 32>}, {pipeline_mode = #tpu.pipeline_mode<synchronous>, transform_indices = @transform_2, window_bounds = array<i64: 1, 32>}, {pipeline_mode = #tpu.pipeline_mode<synchronous>, transform_indices = @transform_3, window_bounds = array<i64: 3, 3, 32, 32>}, {pipeline_mode = #tpu.pipeline_mode<synchronous>, transform_indices = @transform_4, window_bounds = array<i64: 3, 3, 32, 32>}, {pipeline_mode = #tpu.pipeline_mode<synchronous>, transform_indices = @transform_5, window_bounds = array<i64: 3, 1, 32>}, {pipeline_mode = #tpu.pipeline_mode<synchronous>, transform_indices = @transform_6, window_bounds = array<i64: 3, 1, 32>}, {pipeline_mode = #tpu.pipeline_mode<synchronous>, transform_indices = @transform_7, window_bounds = array<i64: 3, 1, 32>}, {pipeline_mode = #tpu.pipeline_mode<synchronous>, transform_indices = @transform_8, window_bounds = array<i64: 3, 1, 32>}, {pipeline_mode = #tpu.pipeline_mode<synchronous>, transform_indices = @transform_9, window_bounds = array<i64: 1, 32>}, {pipeline_mode = #tpu.pipeline_mode<synchronous>, transform_indices = @transform_10, window_bounds = array<i64: 1, 32>}, {transform_indices = @transform_11, window_bounds = array<i64: 32, 128>}, {transform_indices = @transform_12, window_bounds = array<i64: 1, 128>}, {transform_indices = @transform_13, window_bounds = array<i64: 1, 16, 128>}]} {
    %c0_i32 = arith.constant 0 : i32
    %0 = arith.cmpi eq, %arg1, %c0_i32 : i32
    %1 = arith.extui %0 : i1 to i32
    %c0_i32_0 = arith.constant 0 : i32
    %2 = arith.cmpi ne, %1, %c0_i32_0 : i32
    scf.if %2 {
      %cst_9 = arith.constant 0.000000e+00 : bf16
      %12 = vector.broadcast %cst_9 : bf16 to vector<16x32xbf16>
      %c0_10 = arith.constant 0 : index
      %c0_11 = arith.constant 0 : index
      %13 = vector.load %arg16[%c0_10, %c0_11] : memref<48x32xbf16, #tpu.memory_space<vmem>>, vector<16x32xbf16>
      tpu.vector_store %arg16[%c0_10, %c0_11], %12 {strides = array<i32>} : memref<48x32xbf16, #tpu.memory_space<vmem>>, vector<16x32xbf16>,
      %cst_12 = arith.constant 0.000000e+00 : bf16
      %14 = vector.broadcast %cst_12 : bf16 to vector<16x32xbf16>
      %c32 = arith.constant 32 : index
      %c0_13 = arith.constant 0 : index
      %15 = vector.load %arg16[%c32, %c0_13] : memref<48x32xbf16, #tpu.memory_space<vmem>>, vector<16x32xbf16>
      tpu.vector_store %arg16[%c32, %c0_13], %14 {strides = array<i32>} : memref<48x32xbf16, #tpu.memory_space<vmem>>, vector<16x32xbf16>,
      %c0_14 = arith.constant 0 : index
      %c0_15 = arith.constant 0 : index
      %c0_16 = arith.constant 0 : index
      %16 = vector.load %arg2[%c0_14, %c0_15, %c0_16] : memref<1x16x32xf32, #tpu.memory_space<vmem>>, vector<1x16x32xf32>
      %17 = vector.shape_cast %16 : vector<1x16x32xf32> to vector<16x32xf32>
      %c0_17 = arith.constant 0 : index
      %c0_18 = arith.constant 0 : index
      %18 = vector.load %arg3[%c0_17, %c0_18] : memref<1x32xf32, #tpu.memory_space<vmem>>, vector<1x32xf32>
      %c0_19 = arith.constant 0 : index
      %c0_20 = arith.constant 0 : index
      %19 = vector.load %arg4[%c0_19, %c0_20] : memref<1x32xf32, #tpu.memory_space<vmem>>, vector<1x32xf32>
      %cst_21 = arith.constant dense<0.000000e+00> : vector<16xf32>
      %20 = vector.multi_reduction <add>, %17, %cst_21 [1] : vector<16x32xf32> to vector<16xf32>
      %21 = vector.shape_cast %20 : vector<16xf32> to vector<16x1xf32>
      %cst_22 = arith.constant 3.200000e+01 : f32
      %22 = vector.broadcast %cst_22 : f32 to vector<16x1xf32>
      %23 = arith.divf %21, %22 : vector<16x1xf32>
      %24 = vector.broadcast %23 : vector<16x1xf32> to vector<16x32xf32>
      %25 = arith.subf %17, %24 : vector<16x32xf32>
      %26 = arith.mulf %25, %25 : vector<16x32xf32>
      %cst_23 = arith.constant dense<0.000000e+00> : vector<16xf32>
      %27 = vector.multi_reduction <add>, %26, %cst_23 [1] : vector<16x32xf32> to vector<16xf32>
      %28 = vector.shape_cast %27 : vector<16xf32> to vector<16x1xf32>
      %cst_24 = arith.constant 3.200000e+01 : f32
      %29 = vector.broadcast %cst_24 : f32 to vector<16x1xf32>
      %30 = arith.divf %28, %29 : vector<16x1xf32>
      %31 = vector.broadcast %23 : vector<16x1xf32> to vector<16x32xf32>
      %32 = arith.subf %17, %31 : vector<16x32xf32>
      %cst_25 = arith.constant 9.99999974E-6 : f32
      %33 = vector.broadcast %cst_25 : f32 to vector<16x1xf32>
      %34 = arith.addf %30, %33 : vector<16x1xf32>
      %35 = math.rsqrt %34 : vector<16x1xf32>
      %36 = vector.broadcast %35 : vector<16x1xf32> to vector<16x32xf32>
      %37 = arith.mulf %32, %36 : vector<16x32xf32>
      %38 = vector.broadcast %18 : vector<1x32xf32> to vector<16x32xf32>
      %39 = arith.mulf %37, %38 : vector<16x32xf32>
      %40 = vector.broadcast %19 : vector<1x32xf32> to vector<16x32xf32>
      %41 = arith.addf %39, %40 : vector<16x32xf32>
      %42 = arith.truncf %41 : vector<16x32xf32> to vector<16x32xbf16>
      %c16 = arith.constant 16 : index
      %c0_26 = arith.constant 0 : index
      %43 = vector.load %arg16[%c16, %c0_26] : memref<48x32xbf16, #tpu.memory_space<vmem>>, vector<16x32xbf16>
      tpu.vector_store %arg16[%c16, %c0_26], %42 {strides = array<i32>} : memref<48x32xbf16, #tpu.memory_space<vmem>>, vector<16x32xbf16>,
      %c15 = arith.constant 15 : index
      %c0_27 = arith.constant 0 : index
      %44 = vector.load %arg16[%c15, %c0_27] : memref<48x32xbf16, #tpu.memory_space<vmem>>, vector<16x32xbf16>
      %c0_28 = arith.constant 0 : index
      %c0_29 = arith.constant 0 : index
      %c0_30 = arith.constant 0 : index
      %c0_31 = arith.constant 0 : index
      %45 = vector.load %arg5[%c0_28, %c0_29, %c0_30, %c0_31] : memref<3x3x32x32xbf16, #tpu.memory_space<vmem>>, vector<1x1x32x32xbf16>
      %46 = vector.shape_cast %45 : vector<1x1x32x32xbf16> to vector<32x32xbf16>
      %cst_32 = arith.constant dense<0.000000e+00> : vector<16x32xf32>
      %47 = tpu.matmul %44, %46, %cst_32 {dimension_numbers = #tpu.dot_dimension_numbers<[1], [0], [0], [1], [0, 0, 1, 1], [], []>} : vector<16x32xbf16>, vector<32x32xbf16>, vector<16x32xf32> -> vector<16x32xf32>
      %c0_33 = arith.constant 0 : index
      %c0_34 = arith.constant 0 : index
      %c0_35 = arith.constant 0 : index
      %c0_36 = arith.constant 0 : index
      %48 = vector.load %arg6[%c0_33, %c0_34, %c0_35, %c0_36] : memref<3x3x32x32xbf16, #tpu.memory_space<vmem>>, vector<1x1x32x32xbf16>
      %49 = vector.shape_cast %48 : vector<1x1x32x32xbf16> to vector<32x32xbf16>
      %cst_37 = arith.constant dense<0.000000e+00> : vector<16x32xf32>
      %50 = tpu.matmul %44, %49, %cst_37 {dimension_numbers = #tpu.dot_dimension_numbers<[1], [0], [0], [1], [0, 0, 1, 1], [], []>} : vector<16x32xbf16>, vector<32x32xbf16>, vector<16x32xf32> -> vector<16x32xf32>
      %c16_38 = arith.constant 16 : index
      %c0_39 = arith.constant 0 : index
      %51 = vector.load %arg16[%c16_38, %c0_39] : memref<48x32xbf16, #tpu.memory_space<vmem>>, vector<16x32xbf16>
      %c0_40 = arith.constant 0 : index
      %c1 = arith.constant 1 : index
      %c0_41 = arith.constant 0 : index
      %c0_42 = arith.constant 0 : index
      %52 = vector.load %arg5[%c0_40, %c1, %c0_41, %c0_42] : memref<3x3x32x32xbf16, #tpu.memory_space<vmem>>, vector<1x1x32x32xbf16>
      %53 = vector.shape_cast %52 : vector<1x1x32x32xbf16> to vector<32x32xbf16>
      %cst_43 = arith.constant dense<0.000000e+00> : vector<16x32xf32>
      %54 = tpu.matmul %51, %53, %cst_43 {dimension_numbers = #tpu.dot_dimension_numbers<[1], [0], [0], [1], [0, 0, 1, 1], [], []>} : vector<16x32xbf16>, vector<32x32xbf16>, vector<16x32xf32> -> vector<16x32xf32>
      %c0_44 = arith.constant 0 : index
      %c1_45 = arith.constant 1 : index
      %c0_46 = arith.constant 0 : index
      %c0_47 = arith.constant 0 : index
      %55 = vector.load %arg6[%c0_44, %c1_45, %c0_46, %c0_47] : memref<3x3x32x32xbf16, #tpu.memory_space<vmem>>, vector<1x1x32x32xbf16>
      %56 = vector.shape_cast %55 : vector<1x1x32x32xbf16> to vector<32x32xbf16>
      %cst_48 = arith.constant dense<0.000000e+00> : vector<16x32xf32>
      %57 = tpu.matmul %51, %56, %cst_48 {dimension_numbers = #tpu.dot_dimension_numbers<[1], [0], [0], [1], [0, 0, 1, 1], [], []>} : vector<16x32xbf16>, vector<32x32xbf16>, vector<16x32xf32> -> vector<16x32xf32>
      %58 = arith.addf %47, %54 : vector<16x32xf32>
      %59 = arith.addf %50, %57 : vector<16x32xf32>
      %c17 = arith.constant 17 : index
      %c0_49 = arith.constant 0 : index
      %60 = vector.load %arg16[%c17, %c0_49] : memref<48x32xbf16, #tpu.memory_space<vmem>>, vector<16x32xbf16>
      %c0_50 = arith.constant 0 : index
      %c2 = arith.constant 2 : index
      %c0_51 = arith.constant 0 : index
      %c0_52 = arith.constant 0 : index
      %61 = vector.load %arg5[%c0_50, %c2, %c0_51, %c0_52] : memref<3x3x32x32xbf16, #tpu.memory_space<vmem>>, vector<1x1x32x32xbf16>
      %62 = vector.shape_cast %61 : vector<1x1x32x32xbf16> to vector<32x32xbf16>
      %cst_53 = arith.constant dense<0.000000e+00> : vector<16x32xf32>
      %63 = tpu.matmul %60, %62, %cst_53 {dimension_numbers = #tpu.dot_dimension_numbers<[1], [0], [0], [1], [0, 0, 1, 1], [], []>} : vector<16x32xbf16>, vector<32x32xbf16>, vector<16x32xf32> -> vector<16x32xf32>
      %c0_54 = arith.constant 0 : index
      %c2_55 = arith.constant 2 : index
      %c0_56 = arith.constant 0 : index
      %c0_57 = arith.constant 0 : index
      %64 = vector.load %arg6[%c0_54, %c2_55, %c0_56, %c0_57] : memref<3x3x32x32xbf16, #tpu.memory_space<vmem>>, vector<1x1x32x32xbf16>
      %65 = vector.shape_cast %64 : vector<1x1x32x32xbf16> to vector<32x32xbf16>
      %cst_58 = arith.constant dense<0.000000e+00> : vector<16x32xf32>
      %66 = tpu.matmul %60, %65, %cst_58 {dimension_numbers = #tpu.dot_dimension_numbers<[1], [0], [0], [1], [0, 0, 1, 1], [], []>} : vector<16x32xbf16>, vector<32x32xbf16>, vector<16x32xf32> -> vector<16x32xf32>
      %67 = arith.addf %58, %63 : vector<16x32xf32>
      %68 = arith.addf %59, %66 : vector<16x32xf32>
      %c0_59 = arith.constant 0 : index
      %c0_60 = arith.constant 0 : index
      %c0_61 = arith.constant 0 : index
      %69 = vector.load %arg7[%c0_59, %c0_60, %c0_61] : memref<3x1x32xf32, #tpu.memory_space<vmem>>, vector<1x1x32xf32>
      %70 = vector.shape_cast %69 : vector<1x1x32xf32> to vector<1x32xf32>
      %71 = vector.broadcast %70 : vector<1x32xf32> to vector<16x32xf32>
      %72 = arith.addf %67, %71 : vector<16x32xf32>
      %c0_62 = arith.constant 0 : index
      %c0_63 = arith.constant 0 : index
      %c0_64 = arith.constant 0 : index
      %73 = vector.load %arg8[%c0_62, %c0_63, %c0_64] : memref<3x1x32xf32, #tpu.memory_space<vmem>>, vector<1x1x32xf32>
      %74 = vector.shape_cast %73 : vector<1x1x32xf32> to vector<1x32xf32>
      %75 = vector.broadcast %74 : vector<1x32xf32> to vector<16x32xf32>
      %76 = arith.addf %68, %75 : vector<16x32xf32>
      %77 = arith.negf %76 : vector<16x32xf32>
      %78 = math.exp %77 : vector<16x32xf32>
      %cst_65 = arith.constant 1.000000e+00 : f32
      %79 = vector.broadcast %cst_65 : f32 to vector<16x32xf32>
      %80 = arith.addf %79, %78 : vector<16x32xf32>
      %81 = arith.divf %79, %80 : vector<16x32xf32>
      %82 = arith.mulf %72, %81 : vector<16x32xf32>
      %83 = arith.addf %82, %41 : vector<16x32xf32>
      %c0_66 = arith.constant 0 : index
      %c0_67 = arith.constant 0 : index
      %c0_68 = arith.constant 0 : index
      %84 = vector.load %arg9[%c0_66, %c0_67, %c0_68] : memref<3x1x32xf32, #tpu.memory_space<vmem>>, vector<1x1x32xf32>
      %85 = vector.shape_cast %84 : vector<1x1x32xf32> to vector<1x32xf32>
      %c0_69 = arith.constant 0 : index
      %c0_70 = arith.constant 0 : index
      %c0_71 = arith.constant 0 : index
      %86 = vector.load %arg10[%c0_69, %c0_70, %c0_71] : memref<3x1x32xf32, #tpu.memory_space<vmem>>, vector<1x1x32xf32>
      %87 = vector.shape_cast %86 : vector<1x1x32xf32> to vector<1x32xf32>
      %cst_72 = arith.constant dense<0.000000e+00> : vector<16xf32>
      %88 = vector.multi_reduction <add>, %83, %cst_72 [1] : vector<16x32xf32> to vector<16xf32>
      %89 = vector.shape_cast %88 : vector<16xf32> to vector<16x1xf32>
      %cst_73 = arith.constant 3.200000e+01 : f32
      %90 = vector.broadcast %cst_73 : f32 to vector<16x1xf32>
      %91 = arith.divf %89, %90 : vector<16x1xf32>
      %92 = vector.broadcast %91 : vector<16x1xf32> to vector<16x32xf32>
      %93 = arith.subf %83, %92 : vector<16x32xf32>
      %94 = arith.mulf %93, %93 : vector<16x32xf32>
      %cst_74 = arith.constant dense<0.000000e+00> : vector<16xf32>
      %95 = vector.multi_reduction <add>, %94, %cst_74 [1] : vector<16x32xf32> to vector<16xf32>
      %96 = vector.shape_cast %95 : vector<16xf32> to vector<16x1xf32>
      %cst_75 = arith.constant 3.200000e+01 : f32
      %97 = vector.broadcast %cst_75 : f32 to vector<16x1xf32>
      %98 = arith.divf %96, %97 : vector<16x1xf32>
      %99 = vector.broadcast %91 : vector<16x1xf32> to vector<16x32xf32>
      %100 = arith.subf %83, %99 : vector<16x32xf32>
      %cst_76 = arith.constant 9.99999974E-6 : f32
      %101 = vector.broadcast %cst_76 : f32 to vector<16x1xf32>
      %102 = arith.addf %98, %101 : vector<16x1xf32>
      %103 = math.rsqrt %102 : vector<16x1xf32>
      %104 = vector.broadcast %103 : vector<16x1xf32> to vector<16x32xf32>
      %105 = arith.mulf %100, %104 : vector<16x32xf32>
      %106 = vector.broadcast %85 : vector<1x32xf32> to vector<16x32xf32>
      %107 = arith.mulf %105, %106 : vector<16x32xf32>
      %108 = vector.broadcast %87 : vector<1x32xf32> to vector<16x32xf32>
      %109 = arith.addf %107, %108 : vector<16x32xf32>
      %110 = arith.truncf %109 : vector<16x32xf32> to vector<16x32xbf16>
      %c16_77 = arith.constant 16 : index
      %c0_78 = arith.constant 0 : index
      %111 = vector.load %arg16[%c16_77, %c0_78] : memref<48x32xbf16, #tpu.memory_space<vmem>>, vector<16x32xbf16>
      tpu.vector_store %arg16[%c16_77, %c0_78], %110 {strides = array<i32>} : memref<48x32xbf16, #tpu.memory_space<vmem>>, vector<16x32xbf16>,
      %c15_79 = arith.constant 15 : index
      %c0_80 = arith.constant 0 : index
      %112 = vector.load %arg16[%c15_79, %c0_80] : memref<48x32xbf16, #tpu.memory_space<vmem>>, vector<16x32xbf16>
      %c1_81 = arith.constant 1 : index
      %c0_82 = arith.constant 0 : index
      %c0_83 = arith.constant 0 : index
      %c0_84 = arith.constant 0 : index
      %113 = vector.load %arg5[%c1_81, %c0_82, %c0_83, %c0_84] : memref<3x3x32x32xbf16, #tpu.memory_space<vmem>>, vector<1x1x32x32xbf16>
      %114 = vector.shape_cast %113 : vector<1x1x32x32xbf16> to vector<32x32xbf16>
      %cst_85 = arith.constant dense<0.000000e+00> : vector<16x32xf32>
      %115 = tpu.matmul %112, %114, %cst_85 {dimension_numbers = #tpu.dot_dimension_numbers<[1], [0], [0], [1], [0, 0, 1, 1], [], []>} : vector<16x32xbf16>, vector<32x32xbf16>, vector<16x32xf32> -> vector<16x32xf32>
      %c1_86 = arith.constant 1 : index
      %c0_87 = arith.constant 0 : index
      %c0_88 = arith.constant 0 : index
      %c0_89 = arith.constant 0 : index
      %116 = vector.load %arg6[%c1_86, %c0_87, %c0_88, %c0_89] : memref<3x3x32x32xbf16, #tpu.memory_space<vmem>>, vector<1x1x32x32xbf16>
      %117 = vector.shape_cast %116 : vector<1x1x32x32xbf16> to vector<32x32xbf16>
      %cst_90 = arith.constant dense<0.000000e+00> : vector<16x32xf32>
      %118 = tpu.matmul %112, %117, %cst_90 {dimension_numbers = #tpu.dot_dimension_numbers<[1], [0], [0], [1], [0, 0, 1, 1], [], []>} : vector<16x32xbf16>, vector<32x32xbf16>, vector<16x32xf32> -> vector<16x32xf32>
      %c16_91 = arith.constant 16 : index
      %c0_92 = arith.constant 0 : index
      %119 = vector.load %arg16[%c16_91, %c0_92] : memref<48x32xbf16, #tpu.memory_space<vmem>>, vector<16x32xbf16>
      %c1_93 = arith.constant 1 : index
      %c1_94 = arith.constant 1 : index
      %c0_95 = arith.constant 0 : index
      %c0_96 = arith.constant 0 : index
      %120 = vector.load %arg5[%c1_93, %c1_94, %c0_95, %c0_96] : memref<3x3x32x32xbf16, #tpu.memory_space<vmem>>, vector<1x1x32x32xbf16>
      %121 = vector.shape_cast %120 : vector<1x1x32x32xbf16> to vector<32x32xbf16>
      %cst_97 = arith.constant dense<0.000000e+00> : vector<16x32xf32>
      %122 = tpu.matmul %119, %121, %cst_97 {dimension_numbers = #tpu.dot_dimension_numbers<[1], [0], [0], [1], [0, 0, 1, 1], [], []>} : vector<16x32xbf16>, vector<32x32xbf16>, vector<16x32xf32> -> vector<16x32xf32>
      %c1_98 = arith.constant 1 : index
      %c1_99 = arith.constant 1 : index
      %c0_100 = arith.constant 0 : index
      %c0_101 = arith.constant 0 : index
      %123 = vector.load %arg6[%c1_98, %c1_99, %c0_100, %c0_101] : memref<3x3x32x32xbf16, #tpu.memory_space<vmem>>, vector<1x1x32x32xbf16>
      %124 = vector.shape_cast %123 : vector<1x1x32x32xbf16> to vector<32x32xbf16>
      %cst_102 = arith.constant dense<0.000000e+00> : vector<16x32xf32>
      %125 = tpu.matmul %119, %124, %cst_102 {dimension_numbers = #tpu.dot_dimension_numbers<[1], [0], [0], [1], [0, 0, 1, 1], [], []>} : vector<16x32xbf16>, vector<32x32xbf16>, vector<16x32xf32> -> vector<16x32xf32>
      %126 = arith.addf %115, %122 : vector<16x32xf32>
      %127 = arith.addf %118, %125 : vector<16x32xf32>
      %c17_103 = arith.constant 17 : index
      %c0_104 = arith.constant 0 : index
      %128 = vector.load %arg16[%c17_103, %c0_104] : memref<48x32xbf16, #tpu.memory_space<vmem>>, vector<16x32xbf16>
      %c1_105 = arith.constant 1 : index
      %c2_106 = arith.constant 2 : index
      %c0_107 = arith.constant 0 : index
      %c0_108 = arith.constant 0 : index
      %129 = vector.load %arg5[%c1_105, %c2_106, %c0_107, %c0_108] : memref<3x3x32x32xbf16, #tpu.memory_space<vmem>>, vector<1x1x32x32xbf16>
      %130 = vector.shape_cast %129 : vector<1x1x32x32xbf16> to vector<32x32xbf16>
      %cst_109 = arith.constant dense<0.000000e+00> : vector<16x32xf32>
      %131 = tpu.matmul %128, %130, %cst_109 {dimension_numbers = #tpu.dot_dimension_numbers<[1], [0], [0], [1], [0, 0, 1, 1], [], []>} : vector<16x32xbf16>, vector<32x32xbf16>, vector<16x32xf32> -> vector<16x32xf32>
      %c1_110 = arith.constant 1 : index
      %c2_111 = arith.constant 2 : index
      %c0_112 = arith.constant 0 : index
      %c0_113 = arith.constant 0 : index
      %132 = vector.load %arg6[%c1_110, %c2_111, %c0_112, %c0_113] : memref<3x3x32x32xbf16, #tpu.memory_space<vmem>>, vector<1x1x32x32xbf16>
      %133 = vector.shape_cast %132 : vector<1x1x32x32xbf16> to vector<32x32xbf16>
      %cst_114 = arith.constant dense<0.000000e+00> : vector<16x32xf32>
      %134 = tpu.matmul %128, %133, %cst_114 {dimension_numbers = #tpu.dot_dimension_numbers<[1], [0], [0], [1], [0, 0, 1, 1], [], []>} : vector<16x32xbf16>, vector<32x32xbf16>, vector<16x32xf32> -> vector<16x32xf32>
      %135 = arith.addf %126, %131 : vector<16x32xf32>
      %136 = arith.addf %127, %134 : vector<16x32xf32>
      %c1_115 = arith.constant 1 : index
      %c0_116 = arith.constant 0 : index
      %c0_117 = arith.constant 0 : index
      %137 = vector.load %arg7[%c1_115, %c0_116, %c0_117] : memref<3x1x32xf32, #tpu.memory_space<vmem>>, vector<1x1x32xf32>
      %138 = vector.shape_cast %137 : vector<1x1x32xf32> to vector<1x32xf32>
      %139 = vector.broadcast %138 : vector<1x32xf32> to vector<16x32xf32>
      %140 = arith.addf %135, %139 : vector<16x32xf32>
      %c1_118 = arith.constant 1 : index
      %c0_119 = arith.constant 0 : index
      %c0_120 = arith.constant 0 : index
      %141 = vector.load %arg8[%c1_118, %c0_119, %c0_120] : memref<3x1x32xf32, #tpu.memory_space<vmem>>, vector<1x1x32xf32>
      %142 = vector.shape_cast %141 : vector<1x1x32xf32> to vector<1x32xf32>
      %143 = vector.broadcast %142 : vector<1x32xf32> to vector<16x32xf32>
      %144 = arith.addf %136, %143 : vector<16x32xf32>
      %145 = arith.negf %144 : vector<16x32xf32>
      %146 = math.exp %145 : vector<16x32xf32>
      %cst_121 = arith.constant 1.000000e+00 : f32
      %147 = vector.broadcast %cst_121 : f32 to vector<16x32xf32>
      %148 = arith.addf %147, %146 : vector<16x32xf32>
      %149 = arith.divf %147, %148 : vector<16x32xf32>
      %150 = arith.mulf %140, %149 : vector<16x32xf32>
      %151 = arith.addf %150, %109 : vector<16x32xf32>
      %c1_122 = arith.constant 1 : index
      %c0_123 = arith.constant 0 : index
      %c0_124 = arith.constant 0 : index
      %152 = vector.load %arg9[%c1_122, %c0_123, %c0_124] : memref<3x1x32xf32, #tpu.memory_space<vmem>>, vector<1x1x32xf32>
      %153 = vector.shape_cast %152 : vector<1x1x32xf32> to vector<1x32xf32>
      %c1_125 = arith.constant 1 : index
      %c0_126 = arith.constant 0 : index
      %c0_127 = arith.constant 0 : index
      %154 = vector.load %arg10[%c1_125, %c0_126, %c0_127] : memref<3x1x32xf32, #tpu.memory_space<vmem>>, vector<1x1x32xf32>
      %155 = vector.shape_cast %154 : vector<1x1x32xf32> to vector<1x32xf32>
      %cst_128 = arith.constant dense<0.000000e+00> : vector<16xf32>
      %156 = vector.multi_reduction <add>, %151, %cst_128 [1] : vector<16x32xf32> to vector<16xf32>
      %157 = vector.shape_cast %156 : vector<16xf32> to vector<16x1xf32>
      %cst_129 = arith.constant 3.200000e+01 : f32
      %158 = vector.broadcast %cst_129 : f32 to vector<16x1xf32>
      %159 = arith.divf %157, %158 : vector<16x1xf32>
      %160 = vector.broadcast %159 : vector<16x1xf32> to vector<16x32xf32>
      %161 = arith.subf %151, %160 : vector<16x32xf32>
      %162 = arith.mulf %161, %161 : vector<16x32xf32>
      %cst_130 = arith.constant dense<0.000000e+00> : vector<16xf32>
      %163 = vector.multi_reduction <add>, %162, %cst_130 [1] : vector<16x32xf32> to vector<16xf32>
      %164 = vector.shape_cast %163 : vector<16xf32> to vector<16x1xf32>
      %cst_131 = arith.constant 3.200000e+01 : f32
      %165 = vector.broadcast %cst_131 : f32 to vector<16x1xf32>
      %166 = arith.divf %164, %165 : vector<16x1xf32>
      %167 = vector.broadcast %159 : vector<16x1xf32> to vector<16x32xf32>
      %168 = arith.subf %151, %167 : vector<16x32xf32>
      %cst_132 = arith.constant 9.99999974E-6 : f32
      %169 = vector.broadcast %cst_132 : f32 to vector<16x1xf32>
      %170 = arith.addf %166, %169 : vector<16x1xf32>
      %171 = math.rsqrt %170 : vector<16x1xf32>
      %172 = vector.broadcast %171 : vector<16x1xf32> to vector<16x32xf32>
      %173 = arith.mulf %168, %172 : vector<16x32xf32>
      %174 = vector.broadcast %153 : vector<1x32xf32> to vector<16x32xf32>
      %175 = arith.mulf %173, %174 : vector<16x32xf32>
      %176 = vector.broadcast %155 : vector<1x32xf32> to vector<16x32xf32>
      %177 = arith.addf %175, %176 : vector<16x32xf32>
      %178 = arith.truncf %177 : vector<16x32xf32> to vector<16x32xbf16>
      %c16_133 = arith.constant 16 : index
      %c0_134 = arith.constant 0 : index
      %179 = vector.load %arg16[%c16_133, %c0_134] : memref<48x32xbf16, #tpu.memory_space<vmem>>, vector<16x32xbf16>
      tpu.vector_store %arg16[%c16_133, %c0_134], %178 {strides = array<i32>} : memref<48x32xbf16, #tpu.memory_space<vmem>>, vector<16x32xbf16>,
      %c15_135 = arith.constant 15 : index
      %c0_136 = arith.constant 0 : index
      %180 = vector.load %arg16[%c15_135, %c0_136] : memref<48x32xbf16, #tpu.memory_space<vmem>>, vector<16x32xbf16>
      %c2_137 = arith.constant 2 : index
      %c0_138 = arith.constant 0 : index
      %c0_139 = arith.constant 0 : index
      %c0_140 = arith.constant 0 : index
      %181 = vector.load %arg5[%c2_137, %c0_138, %c0_139, %c0_140] : memref<3x3x32x32xbf16, #tpu.memory_space<vmem>>, vector<1x1x32x32xbf16>
      %182 = vector.shape_cast %181 : vector<1x1x32x32xbf16> to vector<32x32xbf16>
      %cst_141 = arith.constant dense<0.000000e+00> : vector<16x32xf32>
      %183 = tpu.matmul %180, %182, %cst_141 {dimension_numbers = #tpu.dot_dimension_numbers<[1], [0], [0], [1], [0, 0, 1, 1], [], []>} : vector<16x32xbf16>, vector<32x32xbf16>, vector<16x32xf32> -> vector<16x32xf32>
      %c2_142 = arith.constant 2 : index
      %c0_143 = arith.constant 0 : index
      %c0_144 = arith.constant 0 : index
      %c0_145 = arith.constant 0 : index
      %184 = vector.load %arg6[%c2_142, %c0_143, %c0_144, %c0_145] : memref<3x3x32x32xbf16, #tpu.memory_space<vmem>>, vector<1x1x32x32xbf16>
      %185 = vector.shape_cast %184 : vector<1x1x32x32xbf16> to vector<32x32xbf16>
      %cst_146 = arith.constant dense<0.000000e+00> : vector<16x32xf32>
      %186 = tpu.matmul %180, %185, %cst_146 {dimension_numbers = #tpu.dot_dimension_numbers<[1], [0], [0], [1], [0, 0, 1, 1], [], []>} : vector<16x32xbf16>, vector<32x32xbf16>, vector<16x32xf32> -> vector<16x32xf32>
      %c16_147 = arith.constant 16 : index
      %c0_148 = arith.constant 0 : index
      %187 = vector.load %arg16[%c16_147, %c0_148] : memref<48x32xbf16, #tpu.memory_space<vmem>>, vector<16x32xbf16>
      %c2_149 = arith.constant 2 : index
      %c1_150 = arith.constant 1 : index
      %c0_151 = arith.constant 0 : index
      %c0_152 = arith.constant 0 : index
      %188 = vector.load %arg5[%c2_149, %c1_150, %c0_151, %c0_152] : memref<3x3x32x32xbf16, #tpu.memory_space<vmem>>, vector<1x1x32x32xbf16>
      %189 = vector.shape_cast %188 : vector<1x1x32x32xbf16> to vector<32x32xbf16>
      %cst_153 = arith.constant dense<0.000000e+00> : vector<16x32xf32>
      %190 = tpu.matmul %187, %189, %cst_153 {dimension_numbers = #tpu.dot_dimension_numbers<[1], [0], [0], [1], [0, 0, 1, 1], [], []>} : vector<16x32xbf16>, vector<32x32xbf16>, vector<16x32xf32> -> vector<16x32xf32>
      %c2_154 = arith.constant 2 : index
      %c1_155 = arith.constant 1 : index
      %c0_156 = arith.constant 0 : index
      %c0_157 = arith.constant 0 : index
      %191 = vector.load %arg6[%c2_154, %c1_155, %c0_156, %c0_157] : memref<3x3x32x32xbf16, #tpu.memory_space<vmem>>, vector<1x1x32x32xbf16>
      %192 = vector.shape_cast %191 : vector<1x1x32x32xbf16> to vector<32x32xbf16>
      %cst_158 = arith.constant dense<0.000000e+00> : vector<16x32xf32>
      %193 = tpu.matmul %187, %192, %cst_158 {dimension_numbers = #tpu.dot_dimension_numbers<[1], [0], [0], [1], [0, 0, 1, 1], [], []>} : vector<16x32xbf16>, vector<32x32xbf16>, vector<16x32xf32> -> vector<16x32xf32>
      %194 = arith.addf %183, %190 : vector<16x32xf32>
      %195 = arith.addf %186, %193 : vector<16x32xf32>
      %c17_159 = arith.constant 17 : index
      %c0_160 = arith.constant 0 : index
      %196 = vector.load %arg16[%c17_159, %c0_160] : memref<48x32xbf16, #tpu.memory_space<vmem>>, vector<16x32xbf16>
      %c2_161 = arith.constant 2 : index
      %c2_162 = arith.constant 2 : index
      %c0_163 = arith.constant 0 : index
      %c0_164 = arith.constant 0 : index
      %197 = vector.load %arg5[%c2_161, %c2_162, %c0_163, %c0_164] : memref<3x3x32x32xbf16, #tpu.memory_space<vmem>>, vector<1x1x32x32xbf16>
      %198 = vector.shape_cast %197 : vector<1x1x32x32xbf16> to vector<32x32xbf16>
      %cst_165 = arith.constant dense<0.000000e+00> : vector<16x32xf32>
      %199 = tpu.matmul %196, %198, %cst_165 {dimension_numbers = #tpu.dot_dimension_numbers<[1], [0], [0], [1], [0, 0, 1, 1], [], []>} : vector<16x32xbf16>, vector<32x32xbf16>, vector<16x32xf32> -> vector<16x32xf32>
      %c2_166 = arith.constant 2 : index
      %c2_167 = arith.constant 2 : index
      %c0_168 = arith.constant 0 : index
      %c0_169 = arith.constant 0 : index
      %200 = vector.load %arg6[%c2_166, %c2_167, %c0_168, %c0_169] : memref<3x3x32x32xbf16, #tpu.memory_space<vmem>>, vector<1x1x32x32xbf16>
      %201 = vector.shape_cast %200 : vector<1x1x32x32xbf16> to vector<32x32xbf16>
      %cst_170 = arith.constant dense<0.000000e+00> : vector<16x32xf32>
      %202 = tpu.matmul %196, %201, %cst_170 {dimension_numbers = #tpu.dot_dimension_numbers<[1], [0], [0], [1], [0, 0, 1, 1], [], []>} : vector<16x32xbf16>, vector<32x32xbf16>, vector<16x32xf32> -> vector<16x32xf32>
      %203 = arith.addf %194, %199 : vector<16x32xf32>
      %204 = arith.addf %195, %202 : vector<16x32xf32>
      %c2_171 = arith.constant 2 : index
      %c0_172 = arith.constant 0 : index
      %c0_173 = arith.constant 0 : index
      %205 = vector.load %arg7[%c2_171, %c0_172, %c0_173] : memref<3x1x32xf32, #tpu.memory_space<vmem>>, vector<1x1x32xf32>
      %206 = vector.shape_cast %205 : vector<1x1x32xf32> to vector<1x32xf32>
      %207 = vector.broadcast %206 : vector<1x32xf32> to vector<16x32xf32>
      %208 = arith.addf %203, %207 : vector<16x32xf32>
      %c2_174 = arith.constant 2 : index
      %c0_175 = arith.constant 0 : index
      %c0_176 = arith.constant 0 : index
      %209 = vector.load %arg8[%c2_174, %c0_175, %c0_176] : memref<3x1x32xf32, #tpu.memory_space<vmem>>, vector<1x1x32xf32>
      %210 = vector.shape_cast %209 : vector<1x1x32xf32> to vector<1x32xf32>
      %211 = vector.broadcast %210 : vector<1x32xf32> to vector<16x32xf32>
      %212 = arith.addf %204, %211 : vector<16x32xf32>
      %213 = arith.negf %212 : vector<16x32xf32>
      %214 = math.exp %213 : vector<16x32xf32>
      %cst_177 = arith.constant 1.000000e+00 : f32
      %215 = vector.broadcast %cst_177 : f32 to vector<16x32xf32>
      %216 = arith.addf %215, %214 : vector<16x32xf32>
      %217 = arith.divf %215, %216 : vector<16x32xf32>
      %218 = arith.mulf %208, %217 : vector<16x32xf32>
      %219 = arith.addf %218, %177 : vector<16x32xf32>
      %c2_178 = arith.constant 2 : index
      %c0_179 = arith.constant 0 : index
      %c0_180 = arith.constant 0 : index
      %220 = vector.load %arg9[%c2_178, %c0_179, %c0_180] : memref<3x1x32xf32, #tpu.memory_space<vmem>>, vector<1x1x32xf32>
      %221 = vector.shape_cast %220 : vector<1x1x32xf32> to vector<1x32xf32>
      %c2_181 = arith.constant 2 : index
      %c0_182 = arith.constant 0 : index
      %c0_183 = arith.constant 0 : index
      %222 = vector.load %arg10[%c2_181, %c0_182, %c0_183] : memref<3x1x32xf32, #tpu.memory_space<vmem>>, vector<1x1x32xf32>
      %223 = vector.shape_cast %222 : vector<1x1x32xf32> to vector<1x32xf32>
      %cst_184 = arith.constant dense<0.000000e+00> : vector<16xf32>
      %224 = vector.multi_reduction <add>, %219, %cst_184 [1] : vector<16x32xf32> to vector<16xf32>
      %225 = vector.shape_cast %224 : vector<16xf32> to vector<16x1xf32>
      %cst_185 = arith.constant 3.200000e+01 : f32
      %226 = vector.broadcast %cst_185 : f32 to vector<16x1xf32>
      %227 = arith.divf %225, %226 : vector<16x1xf32>
      %228 = vector.broadcast %227 : vector<16x1xf32> to vector<16x32xf32>
      %229 = arith.subf %219, %228 : vector<16x32xf32>
      %230 = arith.mulf %229, %229 : vector<16x32xf32>
      %cst_186 = arith.constant dense<0.000000e+00> : vector<16xf32>
      %231 = vector.multi_reduction <add>, %230, %cst_186 [1] : vector<16x32xf32> to vector<16xf32>
      %232 = vector.shape_cast %231 : vector<16xf32> to vector<16x1xf32>
      %cst_187 = arith.constant 3.200000e+01 : f32
      %233 = vector.broadcast %cst_187 : f32 to vector<16x1xf32>
      %234 = arith.divf %232, %233 : vector<16x1xf32>
      %235 = vector.broadcast %227 : vector<16x1xf32> to vector<16x32xf32>
      %236 = arith.subf %219, %235 : vector<16x32xf32>
      %cst_188 = arith.constant 9.99999974E-6 : f32
      %237 = vector.broadcast %cst_188 : f32 to vector<16x1xf32>
      %238 = arith.addf %234, %237 : vector<16x1xf32>
      %239 = math.rsqrt %238 : vector<16x1xf32>
      %240 = vector.broadcast %239 : vector<16x1xf32> to vector<16x32xf32>
      %241 = arith.mulf %236, %240 : vector<16x32xf32>
      %242 = vector.broadcast %221 : vector<1x32xf32> to vector<16x32xf32>
      %243 = arith.mulf %241, %242 : vector<16x32xf32>
      %244 = vector.broadcast %223 : vector<1x32xf32> to vector<16x32xf32>
      %245 = arith.addf %243, %244 : vector<16x32xf32>
      %c0_189 = arith.constant 0 : index
      %c0_190 = arith.constant 0 : index
      %246 = vector.load %arg11[%c0_189, %c0_190] : memref<1x32xf32, #tpu.memory_space<vmem>>, vector<1x32xf32>
      %c0_191 = arith.constant 0 : index
      %c0_192 = arith.constant 0 : index
      %247 = vector.load %arg12[%c0_191, %c0_192] : memref<1x32xf32, #tpu.memory_space<vmem>>, vector<1x32xf32>
      %cst_193 = arith.constant dense<0.000000e+00> : vector<16xf32>
      %248 = vector.multi_reduction <add>, %245, %cst_193 [1] : vector<16x32xf32> to vector<16xf32>
      %249 = vector.shape_cast %248 : vector<16xf32> to vector<16x1xf32>
      %cst_194 = arith.constant 3.200000e+01 : f32
      %250 = vector.broadcast %cst_194 : f32 to vector<16x1xf32>
      %251 = arith.divf %249, %250 : vector<16x1xf32>
      %252 = vector.broadcast %251 : vector<16x1xf32> to vector<16x32xf32>
      %253 = arith.subf %245, %252 : vector<16x32xf32>
      %254 = arith.mulf %253, %253 : vector<16x32xf32>
      %cst_195 = arith.constant dense<0.000000e+00> : vector<16xf32>
      %255 = vector.multi_reduction <add>, %254, %cst_195 [1] : vector<16x32xf32> to vector<16xf32>
      %256 = vector.shape_cast %255 : vector<16xf32> to vector<16x1xf32>
      %cst_196 = arith.constant 3.200000e+01 : f32
      %257 = vector.broadcast %cst_196 : f32 to vector<16x1xf32>
      %258 = arith.divf %256, %257 : vector<16x1xf32>
      %259 = vector.broadcast %251 : vector<16x1xf32> to vector<16x32xf32>
      %260 = arith.subf %245, %259 : vector<16x32xf32>
      %cst_197 = arith.constant 9.99999974E-6 : f32
      %261 = vector.broadcast %cst_197 : f32 to vector<16x1xf32>
      %262 = arith.addf %258, %261 : vector<16x1xf32>
      %263 = math.rsqrt %262 : vector<16x1xf32>
      %264 = vector.broadcast %263 : vector<16x1xf32> to vector<16x32xf32>
      %265 = arith.mulf %260, %264 : vector<16x32xf32>
      %266 = vector.broadcast %246 : vector<1x32xf32> to vector<16x32xf32>
      %267 = arith.mulf %265, %266 : vector<16x32xf32>
      %268 = vector.broadcast %247 : vector<1x32xf32> to vector<16x32xf32>
      %269 = arith.addf %267, %268 : vector<16x32xf32>
      %270 = arith.truncf %269 : vector<16x32xf32> to vector<16x32xbf16>
      %c0_198 = arith.constant 0 : index
      %c0_199 = arith.constant 0 : index
      %271 = vector.load %arg17[%c0_198, %c0_199] : memref<16x32xbf16, #tpu.memory_space<vmem>>, vector<16x32xbf16>
      tpu.vector_store %arg17[%c0_198, %c0_199], %270 {strides = array<i32>} : memref<16x32xbf16, #tpu.memory_space<vmem>>, vector<16x32xbf16>,
    } else {
    }
    %c0 = arith.constant 0 : index
    %c0_1 = arith.constant 0 : index
    %3 = vector.load %arg17[%c0, %c0_1] : memref<16x32xbf16, #tpu.memory_space<vmem>>, vector<16x32xbf16>
    %c0_2 = arith.constant 0 : index
    %c0_3 = arith.constant 0 : index
    %4 = vector.load %arg13[%c0_2, %c0_3] : memref<32x128xbf16, #tpu.memory_space<vmem>>, vector<32x128xbf16>
    %cst = arith.constant dense<0.000000e+00> : vector<16x128xf32>
    %5 = tpu.matmul %3, %4, %cst {dimension_numbers = #tpu.dot_dimension_numbers<[1], [0], [0], [1], [0, 0, 1, 1], [], []>} : vector<16x32xbf16>, vector<32x128xbf16>, vector<16x128xf32> -> vector<16x128xf32>
    %c0_4 = arith.constant 0 : index
    %c0_5 = arith.constant 0 : index
    %6 = vector.load %arg14[%c0_4, %c0_5] : memref<1x128xf32, #tpu.memory_space<vmem>>, vector<1x128xf32>
    %7 = vector.broadcast %6 : vector<1x128xf32> to vector<16x128xf32>
    %8 = arith.addf %5, %7 : vector<16x128xf32>
    %c0_6 = arith.constant 0 : index
    %c0_7 = arith.constant 0 : index
    %c0_8 = arith.constant 0 : index
    %9 = vector.load %arg15[%c0_6, %c0_7, %c0_8] : memref<1x16x128xf32, #tpu.memory_space<vmem>>, vector<1x16x128xf32>
    %10 = vector.shape_cast %9 : vector<1x16x128xf32> to vector<16x128xf32>
    %11 = vector.shape_cast %8 : vector<16x128xf32> to vector<1x16x128xf32>
    tpu.vector_store %arg15[%c0_6, %c0_7, %c0_8], %11 {strides = array<i32>} : memref<1x16x128xf32, #tpu.memory_space<vmem>>, vector<1x16x128xf32>,
    return
  }
  func.func @transform_0(%arg0: i32, %arg1: i32) -> (i32, i32, i32) {
    %c0_i32 = arith.constant 0 : i32
    %c0_i32_0 = arith.constant 0 : i32
    %c0_i32_1 = arith.constant 0 : i32
    return %arg0, %c0_i32, %c0_i32_0 : i32, i32, i32
  }
  func.func @transform_1(%arg0: i32, %arg1: i32) -> (i32, i32) {
    %c0_i32 = arith.constant 0 : i32
    %c0_i32_0 = arith.constant 0 : i32
    %c0_i32_1 = arith.constant 0 : i32
    return %c0_i32, %c0_i32_0 : i32, i32
  }
  func.func @transform_2(%arg0: i32, %arg1: i32) -> (i32, i32) {
    %c0_i32 = arith.constant 0 : i32
    %c0_i32_0 = arith.constant 0 : i32
    %c0_i32_1 = arith.constant 0 : i32
    return %c0_i32, %c0_i32_0 : i32, i32
  }
  func.func @transform_3(%arg0: i32, %arg1: i32) -> (i32, i32, i32, i32) {
    %c0_i32 = arith.constant 0 : i32
    %c0_i32_0 = arith.constant 0 : i32
    %c0_i32_1 = arith.constant 0 : i32
    %c0_i32_2 = arith.constant 0 : i32
    %c0_i32_3 = arith.constant 0 : i32
    return %c0_i32, %c0_i32_0, %c0_i32_1, %c0_i32_2 : i32, i32, i32, i32
  }
  func.func @transform_4(%arg0: i32, %arg1: i32) -> (i32, i32, i32, i32) {
    %c0_i32 = arith.constant 0 : i32
    %c0_i32_0 = arith.constant 0 : i32
    %c0_i32_1 = arith.constant 0 : i32
    %c0_i32_2 = arith.constant 0 : i32
    %c0_i32_3 = arith.constant 0 : i32
    return %c0_i32, %c0_i32_0, %c0_i32_1, %c0_i32_2 : i32, i32, i32, i32
  }
  func.func @transform_5(%arg0: i32, %arg1: i32) -> (i32, i32, i32) {
    %c0_i32 = arith.constant 0 : i32
    %c0_i32_0 = arith.constant 0 : i32
    %c0_i32_1 = arith.constant 0 : i32
    %c0_i32_2 = arith.constant 0 : i32
    return %c0_i32, %c0_i32_0, %c0_i32_1 : i32, i32, i32
  }
  func.func @transform_6(%arg0: i32, %arg1: i32) -> (i32, i32, i32) {
    %c0_i32 = arith.constant 0 : i32
    %c0_i32_0 = arith.constant 0 : i32
    %c0_i32_1 = arith.constant 0 : i32
    %c0_i32_2 = arith.constant 0 : i32
    return %c0_i32, %c0_i32_0, %c0_i32_1 : i32, i32, i32
  }
  func.func @transform_7(%arg0: i32, %arg1: i32) -> (i32, i32, i32) {
    %c0_i32 = arith.constant 0 : i32
    %c0_i32_0 = arith.constant 0 : i32
    %c0_i32_1 = arith.constant 0 : i32
    %c0_i32_2 = arith.constant 0 : i32
    return %c0_i32, %c0_i32_0, %c0_i32_1 : i32, i32, i32
  }
  func.func @transform_8(%arg0: i32, %arg1: i32) -> (i32, i32, i32) {
    %c0_i32 = arith.constant 0 : i32
    %c0_i32_0 = arith.constant 0 : i32
    %c0_i32_1 = arith.constant 0 : i32
    %c0_i32_2 = arith.constant 0 : i32
    return %c0_i32, %c0_i32_0, %c0_i32_1 : i32, i32, i32
  }
  func.func @transform_9(%arg0: i32, %arg1: i32) -> (i32, i32) {
    %c0_i32 = arith.constant 0 : i32
    %c0_i32_0 = arith.constant 0 : i32
    %c0_i32_1 = arith.constant 0 : i32
    return %c0_i32, %c0_i32_0 : i32, i32
  }
  func.func @transform_10(%arg0: i32, %arg1: i32) -> (i32, i32) {
    %c0_i32 = arith.constant 0 : i32
    %c0_i32_0 = arith.constant 0 : i32
    %c0_i32_1 = arith.constant 0 : i32
    return %c0_i32, %c0_i32_0 : i32, i32
  }
  func.func @transform_11(%arg0: i32, %arg1: i32) -> (i32, i32) {
    %c0_i32 = arith.constant 0 : i32
    %c0_i32_0 = arith.constant 0 : i32
    return %c0_i32, %arg1 : i32, i32
  }
  func.func @transform_12(%arg0: i32, %arg1: i32) -> (i32, i32) {
    %c0_i32 = arith.constant 0 : i32
    %c0_i32_0 = arith.constant 0 : i32
    return %c0_i32, %arg1 : i32, i32
  }
  func.func @transform_13(%arg0: i32, %arg1: i32) -> (i32, i32, i32) {
    %c0_i32 = arith.constant 0 : i32
    %c0_i32_0 = arith.constant 0 : i32
    return %arg0, %c0_i32, %arg1 : i32, i32, i32
  }
}

</mosaic_0001>

<llo_original>
// kernel: tpu_custom_call.1
$region0: #{tpu_custom_call.1}
  #allocation0 [shape = 'u32[]', space=smem, size = 0x4, offset = 0x4, fixed_abs, tag = 'smem constant byte address 0x4 - core index']
  #allocation1 [shape = 'u32[72,128]{1,0:T(1,128)}', space=vmem, size = 0x9000, scoped, tag = 'internal scratch']
  #allocation2 [shape = 'bf16[48,32]{1,0:T(8,128)(2,1)}', space=vmem, size = 0x3000, scoped, tag = 'scratch operand']
  #allocation3 [shape = 'bf16[16,32]{1,0:T(8,128)(2,1)}', space=vmem, size = 0x1000, scoped, tag = 'scratch operand']
  %s0 = inlined_call_operand.hbm [shape: f32[2,16,32], index: 0, kind: input, shape index: {}]
  %s1 = inlined_call_operand.hbm [shape: f32[1,32], index: 1, kind: input, shape index: {}]
  %s2 = inlined_call_operand.hbm [shape: f32[1,32], index: 2, kind: input, shape index: {}]
  %s3 = inlined_call_operand.hbm [shape: bf16[3,3,32,32], index: 3, kind: input, shape index: {}]
  %s4 = inlined_call_operand.hbm [shape: bf16[3,3,32,32], index: 4, kind: input, shape index: {}]
  %s5 = inlined_call_operand.vmem [shape: f32[3,1,32], index: 5, kind: input, shape index: {}]
  %s6 = inlined_call_operand.hbm [shape: f32[3,1,32], index: 6, kind: input, shape index: {}]
  %s7 = inlined_call_operand.vmem [shape: f32[3,1,32], index: 7, kind: input, shape index: {}]
  %s8 = inlined_call_operand.hbm [shape: f32[3,1,32], index: 8, kind: input, shape index: {}]
  %s9 = inlined_call_operand.vmem [shape: f32[1,32], index: 9, kind: input, shape index: {}]
  %s10 = inlined_call_operand.vmem [shape: f32[1,32], index: 10, kind: input, shape index: {}]
  %s11 = inlined_call_operand.hbm [shape: bf16[32,128], index: 11, kind: input, shape index: {}]
  %s12 = inlined_call_operand.vmem [shape: f32[1,128], index: 12, kind: input, shape index: {}]
  %s13 = inlined_call_operand.hbm [shape: f32[2,16,128], index: 13, kind: output, shape index: {}]
  %s14 = sld [smem:[#allocation0]]
  $region121: #{tpu_custom_call.1} parent=0
    _
  %s16 = ssub.s32 1, %s14
  %s17 = scalar_select 0, %s16, %s14
  $region1: #{tpu_custom_call.1} parent=0
    #allocation4 [shape = 'u8[16384]{0}', space=vmem, size = 0x4000, scoped, tag = 'input window, operand 0']
    #allocation5 [shape = 's32[2]{0}', space=sflag, size = 0x8, scoped, tag = 'scoped memory for tpu_custom_call.1']
    #allocation6 [shape = 's32[2]{0}', space=sflag, size = 0x8, scoped, tag = 'scoped memory for tpu_custom_call.1']
    #allocation7 [shape = 'u8[512]{0}', space=vmem, size = 0x400, scoped, tag = 'input window, operand 1, single buffered']
    #allocation8 [shape = 's32[1]{0}', space=sflag, size = 0x4, scoped, tag = 'scoped memory for tpu_custom_call.1']
    #allocation9 [shape = 'u8[512]{0}', space=vmem, size = 0x400, scoped, tag = 'input window, operand 2, single buffered']
    #allocation10 [shape = 'u8[73728]{0}', space=vmem, size = 0x12000, scoped, tag = 'input window, operand 3, single buffered']
    #allocation11 [shape = 's32[1]{0}', space=sflag, size = 0x4, scoped, tag = 'scoped memory for tpu_custom_call.1']
    #allocation12 [shape = 'u8[73728]{0}', space=vmem, size = 0x12000, scoped, tag = 'input window, operand 4, single buffered']
    #allocation13 [shape = 'u8[1536]{0}', space=vmem, size = 0x800, scoped, tag = 'input window, operand 6, single buffered']
    #allocation14 [shape = 's32[1]{0}', space=sflag, size = 0x4, scoped, tag = 'scoped memory for tpu_custom_call.1']
    #allocation15 [shape = 'u8[1536]{0}', space=vmem, size = 0x800, scoped, tag = 'input window, operand 8, single buffered']
    #allocation16 [shape = 'u8[8192]{0}', space=vmem, size = 0x2000, scoped, tag = 'input window, operand 11, single buffered']
    #allocation17 [shape = 's32[1]{0}', space=sflag, size = 0x4, scoped, tag = 'scoped memory for tpu_custom_call.1']
    #allocation18 [shape = 'u8[16384]{0}', space=vmem, size = 0x4000, scoped, tag = 'output window, operand 0']
    %18 = vsyncpa [#allocation5], 0
    %s19 = scalar_lea.sflag [#allocation5], 1
    %20 = vsyncpa %s19, 0
    %21 = vsyncpa [#allocation8], 0
    %22 = vsyncpa [#allocation11], 0
    %23 = vsyncpa [#allocation14], 0
    %24 = vsyncpa [#allocation17], 0
    %25 = vsyncpa [#allocation6], 0
    %s26 = scalar_lea.sflag [#allocation6], 1
    %27 = vsyncpa %s26, 0
    loop: start=0, step=1, limit=4
    $region2: #{tpu_custom_call.1} parent=1 // loop_pre_header
      _
    $region3: #{tpu_custom_call.1} parent=1 // loop_header
      %s29 = sphi 0, %s33
      %p30 = scmp.ge.s32.totalorder %s29, 4
      %s36 = sphi 0, %s48
      %s37 = sphi 0, %s44
      %s38 = sphi 0, %s36
      %s39 = sphi 0, %s37
      %s40 = sphi 0, %s38
      %s41 = sphi 0, %s39
      %s51 = sphi 0, %s53
      %s54 = sphi 0, %s51
      %s55 = sphi 0, %s54
      %s71 = sphi 0, %s55
      %s75 = sphi 0, %s75
      %s77 = sphi 0, %s75
      %s78 = sphi 0, %s77
      %s92 = sphi 0, %s78
      %s96 = sphi 0, %s96
      %s98 = sphi 0, %s96
      %s99 = sphi 0, %s98
      %s113 = sphi 0, %s99
      %s117 = sphi 0, %s117
      %s119 = sphi 0, %s117
      %s120 = sphi 0, %s119
      %s134 = sphi 0, %s120
      %s138 = sphi 0, %s138
      %s140 = sphi 0, %s138
      %s141 = sphi 0, %s140
      %s155 = sphi 0, %s141
      %s159 = sphi 0, %s159
      %s161 = sphi 0, %s159
      %s162 = sphi 0, %s161
      %s176 = sphi 0, %s162
      %s180 = sphi 0, %s180
      %s182 = sphi 0, %s180
      %s183 = sphi 0, %s182
      %s197 = sphi 0, %s183
      %s201 = sphi 0, %s201
      %s203 = sphi 0, %s201
      %s204 = sphi 0, %s203
      %s218 = sphi 0, %s204
      %s222 = sphi 0, %s222
      %s224 = sphi 0, %s222
      %s225 = sphi 0, %s224
      %s239 = sphi 0, %s225
      %s243 = sphi 0, %s243
      %s245 = sphi 0, %s243
      %s246 = sphi 0, %s245
      %s260 = sphi 0, %s246
      %s264 = sphi 0, %s264
      %s266 = sphi 0, %s264
      %s267 = sphi 0, %s266
      %s281 = sphi 0, %s267
      %s287 = sphi 0, %s289
      %s290 = sphi 0, %s287
      %s291 = sphi 0, %s290
      %s307 = sphi 0, %s291
      %s313 = sphi 0, %s315
      %s316 = sphi 0, %s313
      %s317 = sphi 0, %s316
      %s333 = sphi 0, %s317
      %s341 = sphi 0, %s343
      %s344 = sphi 0, %s341
      %s345 = sphi 0, %s344
      %s361 = sphi 0, %s345
    $region4: #{tpu_custom_call.1} parent=1 // loop_header_branch
      %32 = sbr.rel (%p30) target = $region8
    $region5: #{tpu_custom_call.1} parent=1 // loop_body
      %s34 = ssub.s32 %s29, 1
      %s35 = ssub.s32 %s29, 2
      %s42 = sadd.s32 1, %s37
      %p43 = scmp.ge.s32.totalorder %s42, 1
      %s44 = scalar_select %p43, 0, %s42
      %s45 = sadd.s32 1, %s36
      %s46 = scalar_select %p43, %s45, %s36
      %p47 = scmp.ge.s32.totalorder %s46, 2
      %s48 = scalar_select %p47, 0, %s46
      %s49 = ssub.s32 %s36, %s48
      %p50 = scmp.eq.s32.totalorder %s49, 0
      %s52 = sadd.s32 %s51, 1
      %s53 = scalar_select %p50, %s51, %s52
      %p56 = pneg %p50
      %p57 = scmp.eq.s32.totalorder %s29, 1
      %p58 = por %p56, %p57
      %p59 = scmp.ne.s32.totalorder %s51, %s54
      %p60 = scmp.eq.s32.totalorder %s29, 0
      %p61 = por %p59, %p60
      %p62 = scmp.ne.s32.totalorder %s51, %s54
      %p63 = scmp.eq.s32.totalorder %s34, 1
      %p64 = por %p62, %p63
      %p65 = scmp.ne.s32.totalorder %s54, %s55
      %p66 = scmp.eq.s32.totalorder %s34, 0
      %p67 = por %p65, %p66
      %p68 = scmp.ne.s32.totalorder %s54, %s55
      %p69 = scmp.eq.s32.totalorder %s35, 1
      %p70 = por %p68, %p69
      %p72 = scmp.ne.s32.totalorder %s55, %s71
      %p73 = scmp.eq.s32.totalorder %s35, 0
      %p74 = por %p72, %p73
      %s76 = sadd.s32 %s75, 1
      %p79 = scmp.eq.s32.totalorder %s29, 1
      %p80 = scmp.ne.s32.totalorder %s75, %s77
      %p81 = scmp.eq.s32.totalorder %s29, 0
      %p82 = por %p80, %p81
      %p83 = scmp.ne.s32.totalorder %s75, %s77
      %p84 = scmp.eq.s32.totalorder %s34, 1
      %p85 = por %p83, %p84
      %p86 = scmp.ne.s32.totalorder %s77, %s78
      %p87 = scmp.eq.s32.totalorder %s34, 0
      %p88 = por %p86, %p87
      %p89 = scmp.ne.s32.totalorder %s77, %s78
      %p90 = scmp.eq.s32.totalorder %s35, 1
      %p91 = por %p89, %p90
      %p93 = scmp.ne.s32.totalorder %s78, %s92
      %p94 = scmp.eq.s32.totalorder %s35, 0
      %p95 = por %p93, %p94
      %s97 = sadd.s32 %s96, 1
      %p100 = scmp.eq.s32.totalorder %s29, 1
      %p101 = scmp.ne.s32.totalorder %s96, %s98
      %p102 = scmp.eq.s32.totalorder %s29, 0
      %p103 = por %p101, %p102
      %p104 = scmp.ne.s32.totalorder %s96, %s98
      %p105 = scmp.eq.s32.totalorder %s34, 1
      %p106 = por %p104, %p105
      %p107 = scmp.ne.s32.totalorder %s98, %s99
      %p108 = scmp.eq.s32.totalorder %s34, 0
      %p109 = por %p107, %p108
      %p110 = scmp.ne.s32.totalorder %s98, %s99
      %p111 = scmp.eq.s32.totalorder %s35, 1
      %p112 = por %p110, %p111
      %p114 = scmp.ne.s32.totalorder %s99, %s113
      %p115 = scmp.eq.s32.totalorder %s35, 0
      %p116 = por %p114, %p115
      %s118 = sadd.s32 %s117, 1
      %p121 = scmp.eq.s32.totalorder %s29, 1
      %p122 = scmp.ne.s32.totalorder %s117, %s119
      %p123 = scmp.eq.s32.totalorder %s29, 0
      %p124 = por %p122, %p123
      %p125 = scmp.ne.s32.totalorder %s117, %s119
      %p126 = scmp.eq.s32.totalorder %s34, 1
      %p127 = por %p125, %p126
      %p128 = scmp.ne.s32.totalorder %s119, %s120
      %p129 = scmp.eq.s32.totalorder %s34, 0
      %p130 = por %p128, %p129
      %p131 = scmp.ne.s32.totalorder %s119, %s120
      %p132 = scmp.eq.s32.totalorder %s35, 1
      %p133 = por %p131, %p132
      %p135 = scmp.ne.s32.totalorder %s120, %s134
      %p136 = scmp.eq.s32.totalorder %s35, 0
      %p137 = por %p135, %p136
      %s139 = sadd.s32 %s138, 1
      %p142 = scmp.eq.s32.totalorder %s29, 1
      %p143 = scmp.ne.s32.totalorder %s138, %s140
      %p144 = scmp.eq.s32.totalorder %s29, 0
      %p145 = por %p143, %p144
      %p146 = scmp.ne.s32.totalorder %s138, %s140
      %p147 = scmp.eq.s32.totalorder %s34, 1
      %p148 = por %p146, %p147
      %p149 = scmp.ne.s32.totalorder %s140, %s141
      %p150 = scmp.eq.s32.totalorder %s34, 0
      %p151 = por %p149, %p150
      %p152 = scmp.ne.s32.totalorder %s140, %s141
      %p153 = scmp.eq.s32.totalorder %s35, 1
      %p154 = por %p152, %p153
      %p156 = scmp.ne.s32.totalorder %s141, %s155
      %p157 = scmp.eq.s32.totalorder %s35, 0
      %p158 = por %p156, %p157
      %s160 = sadd.s32 %s159, 1
      %p163 = scmp.eq.s32.totalorder %s29, 1
      %p164 = scmp.ne.s32.totalorder %s159, %s161
      %p165 = scmp.eq.s32.totalorder %s29, 0
      %p166 = por %p164, %p165
      %p167 = scmp.ne.s32.totalorder %s159, %s161
      %p168 = scmp.eq.s32.totalorder %s34, 1
      %p169 = por %p167, %p168
      %p170 = scmp.ne.s32.totalorder %s161, %s162
      %p171 = scmp.eq.s32.totalorder %s34, 0
      %p172 = por %p170, %p171
      %p173 = scmp.ne.s32.totalorder %s161, %s162
      %p174 = scmp.eq.s32.totalorder %s35, 1
      %p175 = por %p173, %p174
      %p177 = scmp.ne.s32.totalorder %s162, %s176
      %p178 = scmp.eq.s32.totalorder %s35, 0
      %p179 = por %p177, %p178
      %s181 = sadd.s32 %s180, 1
      %p184 = scmp.eq.s32.totalorder %s29, 1
      %p185 = scmp.ne.s32.totalorder %s180, %s182
      %p186 = scmp.eq.s32.totalorder %s29, 0
      %p187 = por %p185, %p186
      %p188 = scmp.ne.s32.totalorder %s180, %s182
      %p189 = scmp.eq.s32.totalorder %s34, 1
      %p190 = por %p188, %p189
      %p191 = scmp.ne.s32.totalorder %s182, %s183
      %p192 = scmp.eq.s32.totalorder %s34, 0
      %p193 = por %p191, %p192
      %p194 = scmp.ne.s32.totalorder %s182, %s183
      %p195 = scmp.eq.s32.totalorder %s35, 1
      %p196 = por %p194, %p195
      %p198 = scmp.ne.s32.totalorder %s183, %s197
      %p199 = scmp.eq.s32.totalorder %s35, 0
      %p200 = por %p198, %p199
      %s202 = sadd.s32 %s201, 1
      %p205 = scmp.eq.s32.totalorder %s29, 1
      %p206 = scmp.ne.s32.totalorder %s201, %s203
      %p207 = scmp.eq.s32.totalorder %s29, 0
      %p208 = por %p206, %p207
      %p209 = scmp.ne.s32.totalorder %s201, %s203
      %p210 = scmp.eq.s32.totalorder %s34, 1
      %p211 = por %p209, %p210
      %p212 = scmp.ne.s32.totalorder %s203, %s204
      %p213 = scmp.eq.s32.totalorder %s34, 0
      %p214 = por %p212, %p213
      %p215 = scmp.ne.s32.totalorder %s203, %s204
      %p216 = scmp.eq.s32.totalorder %s35, 1
      %p217 = por %p215, %p216
      %p219 = scmp.ne.s32.totalorder %s204, %s218
      %p220 = scmp.eq.s32.totalorder %s35, 0
      %p221 = por %p219, %p220
      %s223 = sadd.s32 %s222, 1
      %p226 = scmp.eq.s32.totalorder %s29, 1
      %p227 = scmp.ne.s32.totalorder %s222, %s224
      %p228 = scmp.eq.s32.totalorder %s29, 0
      %p229 = por %p227, %p228
      %p230 = scmp.ne.s32.totalorder %s222, %s224
      %p231 = scmp.eq.s32.totalorder %s34, 1
      %p232 = por %p230, %p231
      %p233 = scmp.ne.s32.totalorder %s224, %s225
      %p234 = scmp.eq.s32.totalorder %s34, 0
      %p235 = por %p233, %p234
      %p236 = scmp.ne.s32.totalorder %s224, %s225
      %p237 = scmp.eq.s32.totalorder %s35, 1
      %p238 = por %p236, %p237
      %p240 = scmp.ne.s32.totalorder %s225, %s239
      %p241 = scmp.eq.s32.totalorder %s35, 0
      %p242 = por %p240, %p241
      %s244 = sadd.s32 %s243, 1
      %p247 = scmp.eq.s32.totalorder %s29, 1
      %p248 = scmp.ne.s32.totalorder %s243, %s245
      %p249 = scmp.eq.s32.totalorder %s29, 0
      %p250 = por %p248, %p249
      %p251 = scmp.ne.s32.totalorder %s243, %s245
      %p252 = scmp.eq.s32.totalorder %s34, 1
      %p253 = por %p251, %p252
      %p254 = scmp.ne.s32.totalorder %s245, %s246
      %p255 = scmp.eq.s32.totalorder %s34, 0
      %p256 = por %p254, %p255
      %p257 = scmp.ne.s32.totalorder %s245, %s246
      %p258 = scmp.eq.s32.totalorder %s35, 1
      %p259 = por %p257, %p258
      %p261 = scmp.ne.s32.totalorder %s246, %s260
      %p262 = scmp.eq.s32.totalorder %s35, 0
      %p263 = por %p261, %p262
      %s265 = sadd.s32 %s264, 1
      %p268 = scmp.eq.s32.totalorder %s29, 1
      %p269 = scmp.ne.s32.totalorder %s264, %s266
      %p270 = scmp.eq.s32.totalorder %s29, 0
      %p271 = por %p269, %p270
      %p272 = scmp.ne.s32.totalorder %s264, %s266
      %p273 = scmp.eq.s32.totalorder %s34, 1
      %p274 = por %p272, %p273
      %p275 = scmp.ne.s32.totalorder %s266, %s267
      %p276 = scmp.eq.s32.totalorder %s34, 0
      %p277 = por %p275, %p276
      %p278 = scmp.ne.s32.totalorder %s266, %s267
      %p279 = scmp.eq.s32.totalorder %s35, 1
      %p280 = por %p278, %p279
      %p282 = scmp.ne.s32.totalorder %s267, %s281
      %p283 = scmp.eq.s32.totalorder %s35, 0
      %p284 = por %p282, %p283
      %s285 = ssub.s32 %s37, %s44
      %p286 = scmp.eq.s32.totalorder %s285, 0
      %s288 = sadd.s32 %s287, 1
      %s289 = scalar_select %p286, %s287, %s288
      %p292 = pneg %p286
      %p293 = scmp.eq.s32.totalorder %s29, 1
      %p294 = por %p292, %p293
      %p295 = scmp.ne.s32.totalorder %s287, %s290
      %p296 = scmp.eq.s32.totalorder %s29, 0
      %p297 = por %p295, %p296
      %p298 = scmp.ne.s32.totalorder %s287, %s290
      %p299 = scmp.eq.s32.totalorder %s34, 1
      %p300 = por %p298, %p299
      %p301 = scmp.ne.s32.totalorder %s290, %s291
      %p302 = scmp.eq.s32.totalorder %s34, 0
      %p303 = por %p301, %p302
      %p304 = scmp.ne.s32.totalorder %s290, %s291
      %p305 = scmp.eq.s32.totalorder %s35, 1
      %p306 = por %p304, %p305
      %p308 = scmp.ne.s32.totalorder %s291, %s307
      %p309 = scmp.eq.s32.totalorder %s35, 0
      %p310 = por %p308, %p309
      %s311 = ssub.s32 %s37, %s44
      %p312 = scmp.eq.s32.totalorder %s311, 0
      %s314 = sadd.s32 %s313, 1
      %s315 = scalar_select %p312, %s313, %s314
      %p318 = pneg %p312
      %p319 = scmp.eq.s32.totalorder %s29, 1
      %p320 = por %p318, %p319
      %p321 = scmp.ne.s32.totalorder %s313, %s316
      %p322 = scmp.eq.s32.totalorder %s29, 0
      %p323 = por %p321, %p322
      %p324 = scmp.ne.s32.totalorder %s313, %s316
      %p325 = scmp.eq.s32.totalorder %s34, 1
      %p326 = por %p324, %p325
      %p327 = scmp.ne.s32.totalorder %s316, %s317
      %p328 = scmp.eq.s32.totalorder %s34, 0
      %p329 = por %p327, %p328
      %p330 = scmp.ne.s32.totalorder %s316, %s317
      %p331 = scmp.eq.s32.totalorder %s35, 1
      %p332 = por %p330, %p331
      %p334 = scmp.ne.s32.totalorder %s317, %s333
      %p335 = scmp.eq.s32.totalorder %s35, 0
      %p336 = por %p334, %p335
      %s337 = ssub.s32 %s36, %s48
      %s338 = ssub.s32 %s37, %s44
      %s339 = sor.u32 %s337, %s338
      %p340 = scmp.eq.s32.totalorder %s339, 0
      %s342 = sadd.s32 %s341, 1
      %s343 = scalar_select %p340, %s341, %s342
      %p346 = pneg %p340
      %p347 = scmp.eq.s32.totalorder %s29, 1
      %p348 = por %p346, %p347
      %p349 = scmp.ne.s32.totalorder %s341, %s344
      %p350 = scmp.eq.s32.totalorder %s29, 0
      %p351 = por %p349, %p350
      %p352 = scmp.ne.s32.totalorder %s341, %s344
      %p353 = scmp.eq.s32.totalorder %s34, 1
      %p354 = por %p352, %p353
      %p355 = scmp.ne.s32.totalorder %s344, %s345
      %p356 = scmp.eq.s32.totalorder %s34, 0
      %p357 = por %p355, %p356
      %p358 = scmp.ne.s32.totalorder %s344, %s345
      %p359 = scmp.eq.s32.totalorder %s35, 1
      %p360 = por %p358, %p359
      %p362 = scmp.ne.s32.totalorder %s345, %s361
      %p363 = scmp.eq.s32.totalorder %s35, 0
      %p364 = por %p362, %p363
      %p365 = scmp.le.s32.totalorder 1, %s29
      %p366 = scmp.lt.s32.totalorder %s29, 3
      %p367 = pnand %p365, %p366
      %p368 = pneg %p367
      // Predicated region
      $region9: #{tpu_custom_call.1} parent=5 // pred_check
        _
      $region10: #{tpu_custom_call.1} parent=5 // pred_check_branch
        %370 = sbr.rel (%p367) target = $region12
      $region11: #{tpu_custom_call.1} parent=5 // pred_region
        %s371 = ssub.s32 %s29, 1
        // Predicated region
        $region13: #{tpu_custom_call.1} parent=11 // pred_check
          %p372 = pneg %p88
        $region14: #{tpu_custom_call.1} parent=11 // pred_check_branch
          %374 = sbr.rel (%p372) target = $region16
        $region15: #{tpu_custom_call.1} parent=11 // pred_region
          %376 = vsyncadd [#allocation8], 0
          %s378 = sshll.u32 %s1, 4
          %s379 = int_to_ptr.hbm [resolvable:$true] %s378
          %s380 = sshll.u32 [#allocation7], 4
          %s381 = int_to_ptr.vmem [resolvable:$true] %s380
          %383 = dma.hbm_to_vmem [thread:$0]  %s379, 16, %s381, [#allocation8]
        $region16: #{tpu_custom_call.1} parent=11 // pred_fallthru
          _
        // Predicated region
        $region17: #{tpu_custom_call.1} parent=11 // pred_check
          %p384 = pneg %p109
        $region18: #{tpu_custom_call.1} parent=11 // pred_check_branch
          %386 = sbr.rel (%p384) target = $region20
        $region19: #{tpu_custom_call.1} parent=11 // pred_region
          %388 = vsyncadd [#allocation8], 0
          %s390 = sshll.u32 %s2, 4
          %s391 = int_to_ptr.hbm [resolvable:$true] %s390
          %s392 = sshll.u32 [#allocation9], 4
          %s393 = int_to_ptr.vmem [resolvable:$true] %s392
          %395 = dma.hbm_to_vmem [thread:$0]  %s391, 16, %s393, [#allocation8]
        $region20: #{tpu_custom_call.1} parent=11 // pred_fallthru
          _
        // Predicated region
        $region21: #{tpu_custom_call.1} parent=11 // pred_check
          %p396 = pneg %p130
        $region22: #{tpu_custom_call.1} parent=11 // pred_check_branch
          %398 = sbr.rel (%p396) target = $region24
        $region23: #{tpu_custom_call.1} parent=11 // pred_region
          %400 = vsyncadd [#allocation11], 0
          %s401 = sshll.u32 %s3, 4
          %s402 = int_to_ptr.hbm [resolvable:$true] %s401
          %s403 = sshll.u32 [#allocation10], 4
          %s404 = int_to_ptr.vmem [resolvable:$true] %s403
          %409 = dma.hbm_to_vmem [thread:$0]  %s402, 2304, %s404, [#allocation11], 64, 64, 4
        $region24: #{tpu_custom_call.1} parent=11 // pred_fallthru
          _
        // Predicated region
        $region25: #{tpu_custom_call.1} parent=11 // pred_check
          %p410 = pneg %p151
        $region26: #{tpu_custom_call.1} parent=11 // pred_check_branch
          %412 = sbr.rel (%p410) target = $region28
        $region27: #{tpu_custom_call.1} parent=11 // pred_region
          %414 = vsyncadd [#allocation11], 0
          %s415 = sshll.u32 %s4, 4
          %s416 = int_to_ptr.hbm [resolvable:$true] %s415
          %s417 = sshll.u32 [#allocation12], 4
          %s418 = int_to_ptr.vmem [resolvable:$true] %s417
          %423 = dma.hbm_to_vmem [thread:$0]  %s416, 2304, %s418, [#allocation11], 64, 64, 4
        $region28: #{tpu_custom_call.1} parent=11 // pred_fallthru
          _
        // Predicated region
        $region29: #{tpu_custom_call.1} parent=11 // pred_check
          %p424 = pneg %p172
        $region30: #{tpu_custom_call.1} parent=11 // pred_check_branch
          %426 = sbr.rel (%p424) target = $region32
        $region31: #{tpu_custom_call.1} parent=11 // pred_region
          _
        $region32: #{tpu_custom_call.1} parent=11 // pred_fallthru
          _
        // Predicated region
        $region33: #{tpu_custom_call.1} parent=11 // pred_check
          %p427 = pneg %p193
        $region34: #{tpu_custom_call.1} parent=11 // pred_check_branch
          %429 = sbr.rel (%p427) target = $region36
        $region35: #{tpu_custom_call.1} parent=11 // pred_region
          %431 = vsyncadd [#allocation14], 0
          %s432 = sshll.u32 %s6, 4
          %s433 = int_to_ptr.hbm [resolvable:$true] %s432
          %s434 = sshll.u32 [#allocation13], 4
          %s435 = int_to_ptr.vmem [resolvable:$true] %s434
          %440 = dma.hbm_to_vmem [thread:$0]  %s433, 48, %s435, [#allocation14], 16, 16, 1
        $region36: #{tpu_custom_call.1} parent=11 // pred_fallthru
          _
        // Predicated region
        $region37: #{tpu_custom_call.1} parent=11 // pred_check
          %p441 = pneg %p214
        $region38: #{tpu_custom_call.1} parent=11 // pred_check_branch
          %443 = sbr.rel (%p441) target = $region40
        $region39: #{tpu_custom_call.1} parent=11 // pred_region
          _
        $region40: #{tpu_custom_call.1} parent=11 // pred_fallthru
          _
        // Predicated region
        $region41: #{tpu_custom_call.1} parent=11 // pred_check
          %p444 = pneg %p235
        $region42: #{tpu_custom_call.1} parent=11 // pred_check_branch
          %446 = sbr.rel (%p444) target = $region44
        $region43: #{tpu_custom_call.1} parent=11 // pred_region
          %448 = vsyncadd [#allocation14], 0
          %s449 = sshll.u32 %s8, 4
          %s450 = int_to_ptr.hbm [resolvable:$true] %s449
          %s451 = sshll.u32 [#allocation15], 4
          %s452 = int_to_ptr.vmem [resolvable:$true] %s451
          %457 = dma.hbm_to_vmem [thread:$0]  %s450, 48, %s452, [#allocation14], 16, 16, 1
        $region44: #{tpu_custom_call.1} parent=11 // pred_fallthru
          _
        // Predicated region
        $region45: #{tpu_custom_call.1} parent=11 // pred_check
          %p458 = pneg %p256
        $region46: #{tpu_custom_call.1} parent=11 // pred_check_branch
          %460 = sbr.rel (%p458) target = $region48
        $region47: #{tpu_custom_call.1} parent=11 // pred_region
          _
        $region48: #{tpu_custom_call.1} parent=11 // pred_fallthru
          _
        // Predicated region
        $region49: #{tpu_custom_call.1} parent=11 // pred_check
          %p461 = pneg %p277
        $region50: #{tpu_custom_call.1} parent=11 // pred_check_branch
          %463 = sbr.rel (%p461) target = $region52
        $region51: #{tpu_custom_call.1} parent=11 // pred_region
          _
        $region52: #{tpu_custom_call.1} parent=11 // pred_fallthru
          _
        // Predicated region
        $region53: #{tpu_custom_call.1} parent=11 // pred_check
          %p464 = pneg %p303
        $region54: #{tpu_custom_call.1} parent=11 // pred_check_branch
          %466 = sbr.rel (%p464) target = $region56
        $region55: #{tpu_custom_call.1} parent=11 // pred_region
          %468 = vsyncadd [#allocation17], 0
          %s469 = smul.addr %s39, 4
          %s470 = scalar_lea.hbm %s11, %s469
          %s471 = sshll.u32 %s470, 4
          %s472 = int_to_ptr.hbm [resolvable:$true] %s471
          %s473 = sshll.u32 [#allocation16], 4
          %s474 = int_to_ptr.vmem [resolvable:$true] %s473
          %479 = dma.hbm_to_vmem [thread:$0]  %s472, 256, %s474, [#allocation17], 64, 64, 4
        $region56: #{tpu_custom_call.1} parent=11 // pred_fallthru
          _
        // Predicated region
        $region57: #{tpu_custom_call.1} parent=11 // pred_check
          %p480 = pneg %p329
        $region58: #{tpu_custom_call.1} parent=11 // pred_check_branch
          %482 = sbr.rel (%p480) target = $region60
        $region59: #{tpu_custom_call.1} parent=11 // pred_region
          %p483 = scmp.lt.s32.totalorder %s39, 0
          %s484 = scalar_select %p483, %s39, 0
          %s485 = scalar_lea.vmem %s12, %s484
        $region60: #{tpu_custom_call.1} parent=11 // pred_fallthru
          _
      $region12: #{tpu_custom_call.1} parent=5 // pred_fallthru
        _
      %p486 = scmp.lt.s32.totalorder %s29, 2
      // Predicated region
      $region61: #{tpu_custom_call.1} parent=5 // pred_check
        %p487 = pneg %p486
      $region62: #{tpu_custom_call.1} parent=5 // pred_check_branch
        %489 = sbr.rel (%p487) target = $region64
      $region63: #{tpu_custom_call.1} parent=5 // pred_region
        // Predicated region
        $region65: #{tpu_custom_call.1} parent=63 // pred_check
          %p490 = pneg %p61
        $region66: #{tpu_custom_call.1} parent=63 // pred_check_branch
          %492 = sbr.rel (%p490) target = $region68
        $region67: #{tpu_custom_call.1} parent=63 // pred_region
          %s493 = sand.u32 %s51, 1
          %s494 = scalar_lea.sflag [#allocation5], %s493
          %s495 = sand.u32 %s51, 1
          %s496 = smul.addr %s495, 16
          %s497 = scalar_lea.vmem [#allocation4], %s496
          %499 = vsyncadd %s494, 0
          %s500 = smul.addr %s36, 2
          %s501 = smul.addr %s500, 8
          %s502 = scalar_lea.hbm %s0, %s501
          %s503 = sshll.u32 %s502, 4
          %s504 = int_to_ptr.hbm [resolvable:$true] %s503
          %s505 = sshll.u32 %s497, 4
          %s506 = int_to_ptr.vmem [resolvable:$true] %s505
          %511 = dma.hbm_to_vmem [thread:$0]  %s504, 256, %s506, %s494, 128, 128, 8
        $region68: #{tpu_custom_call.1} parent=63 // pred_fallthru
          _
      $region64: #{tpu_custom_call.1} parent=5 // pred_fallthru
        _
      %p512 = scmp.le.s32.totalorder 1, %s29
      %p513 = scmp.lt.s32.totalorder %s29, 3
      %p514 = pnand %p512, %p513
      %p515 = pneg %p514
      // Predicated region
      $region69: #{tpu_custom_call.1} parent=5 // pred_check
        _
      $region70: #{tpu_custom_call.1} parent=5 // pred_check_branch
        %517 = sbr.rel (%p514) target = $region72
      $region71: #{tpu_custom_call.1} parent=5 // pred_region
        %s518 = ssub.s32 %s29, 1
        %s519 = sand.u32 %s54, 1
        %s520 = scalar_lea.sflag [#allocation5], %s519
        %s521 = sand.u32 %s54, 1
        %s522 = smul.addr %s521, 16
        %s523 = scalar_lea.vmem [#allocation4], %s522
        // Predicated region
        $region73: #{tpu_custom_call.1} parent=71 // pred_check
          %p524 = pneg %p67
        $region74: #{tpu_custom_call.1} parent=71 // pred_check_branch
          %526 = sbr.rel (%p524) target = $region76
        $region75: #{tpu_custom_call.1} parent=71 // pred_region
          %528 = dma.done %s520, 256
        $region76: #{tpu_custom_call.1} parent=71 // pred_fallthru
          _
        // Predicated region
        $region77: #{tpu_custom_call.1} parent=71 // pred_check
          %p529 = pneg %p88
        $region78: #{tpu_custom_call.1} parent=71 // pred_check_branch
          %531 = sbr.rel (%p529) target = $region80
        $region79: #{tpu_custom_call.1} parent=71 // pred_region
          %533 = dma.done [#allocation8], 16
        $region80: #{tpu_custom_call.1} parent=71 // pred_fallthru
          _
        // Predicated region
        $region81: #{tpu_custom_call.1} parent=71 // pred_check
          %p534 = pneg %p109
        $region82: #{tpu_custom_call.1} parent=71 // pred_check_branch
          %536 = sbr.rel (%p534) target = $region84
        $region83: #{tpu_custom_call.1} parent=71 // pred_region
          %538 = dma.done [#allocation8], 16
        $region84: #{tpu_custom_call.1} parent=71 // pred_fallthru
          _
        // Predicated region
        $region85: #{tpu_custom_call.1} parent=71 // pred_check
          %p539 = pneg %p130
        $region86: #{tpu_custom_call.1} parent=71 // pred_check_branch
          %541 = sbr.rel (%p539) target = $region88
        $region87: #{tpu_custom_call.1} parent=71 // pred_region
          %543 = dma.done [#allocation11], 2304
        $region88: #{tpu_custom_call.1} parent=71 // pred_fallthru
          _
        // Predicated region
        $region89: #{tpu_custom_call.1} parent=71 // pred_check
          %p544 = pneg %p151
        $region90: #{tpu_custom_call.1} parent=71 // pred_check_branch
          %546 = sbr.rel (%p544) target = $region92
        $region91: #{tpu_custom_call.1} parent=71 // pred_region
          %548 = dma.done [#allocation11], 2304
        $region92: #{tpu_custom_call.1} parent=71 // pred_fallthru
          _
        // Predicated region
        $region93: #{tpu_custom_call.1} parent=71 // pred_check
          %p549 = pneg %p193
        $region94: #{tpu_custom_call.1} parent=71 // pred_check_branch
          %551 = sbr.rel (%p549) target = $region96
        $region95: #{tpu_custom_call.1} parent=71 // pred_region
          %553 = dma.done [#allocation14], 48
        $region96: #{tpu_custom_call.1} parent=71 // pred_fallthru
          _
        // Predicated region
        $region97: #{tpu_custom_call.1} parent=71 // pred_check
          %p554 = pneg %p235
        $region98: #{tpu_custom_call.1} parent=71 // pred_check_branch
          %556 = sbr.rel (%p554) target = $region100
        $region99: #{tpu_custom_call.1} parent=71 // pred_region
          %558 = dma.done [#allocation14], 48
        $region100: #{tpu_custom_call.1} parent=71 // pred_fallthru
          _
        // Predicated region
        $region101: #{tpu_custom_call.1} parent=71 // pred_check
          %p559 = pneg %p303
        $region102: #{tpu_custom_call.1} parent=71 // pred_check_branch
          %561 = sbr.rel (%p559) target = $region104
        $region103: #{tpu_custom_call.1} parent=71 // pred_region
          %563 = dma.done [#allocation17], 256
        $region104: #{tpu_custom_call.1} parent=71 // pred_fallthru
          _
        %s564 = sand.u32 %s54, 1
        %s565 = scalar_lea.sflag [#allocation5], %s564
        %s566 = sand.u32 %s54, 1
        %s567 = smul.addr %s566, 16
        %s568 = scalar_lea.vmem [#allocation4], %s567
        %p569 = pneg %p67
        %p570 = pneg %p64
        %p571 = pneg %p88
        %p572 = pneg %p85
        %p573 = pneg %p109
        %p574 = pneg %p106
        %p575 = pneg %p130
        %p576 = pneg %p127
        %p577 = pneg %p151
        %p578 = pneg %p148
        %p579 = pneg %p172
        %p580 = pneg %p169
        %p581 = pneg %p193
        %p582 = pneg %p190
        %p583 = pneg %p214
        %p584 = pneg %p211
        %p585 = pneg %p235
        %p586 = pneg %p232
        %p587 = pneg %p256
        %p588 = pneg %p253
        %p589 = pneg %p277
        %p590 = pneg %p274
        %p591 = pneg %p303
        %p592 = pneg %p300
        %p593 = scmp.lt.s32.totalorder %s39, 0
        %s594 = scalar_select %p593, %s39, 0
        %s595 = scalar_lea.vmem %s12, %s594
        %p596 = pneg %p329
        %p597 = pneg %p326
        %p598 = pneg %p357
        %p599 = pneg %p354
        %s600 = sand.u32 %s344, 1
        %s601 = scalar_lea.sflag [#allocation6], %s600
        %s602 = sand.u32 %s344, 1
        %s603 = smul.addr %s602, 16
        %s604 = scalar_lea.vmem [#allocation18], %s603
        %p605 = scmp.lt.s32.totalorder %s39, 0
        %s606 = scalar_select %p605, %s39, 0
        %s607 = scalar_lea.vmem %s12, %s606
        %p609 = scmp.eq.s32.totalorder %s39, 0
        // Predicated region
        $region105: #{tpu_custom_call.1} parent=71 // pred_check
          %p610 = pneg %p609
        $region106: #{tpu_custom_call.1} parent=71 // pred_check_branch
          %612 = sbr.rel (%p610) target = $region108
        $region107: #{tpu_custom_call.1} parent=71 // pred_region
          %vm613 = vcmask 257024
          %614 = vst.msk [vmem:[#allocation2] sm:$0xf] %vm613, 0
          %615 = vst.msk [vmem:[#allocation2 + $0x4] sm:$0xf] %vm613, 0
          %616 = vst.msk [vmem:[#allocation2 + $0x10] sm:$0xf] %vm613, 0
          %617 = vst.msk [vmem:[#allocation2 + $0x14] sm:$0xf] %vm613, 0
          %v618 = vld [vmem:[%s523] sm:$0xff]
          %v619 = vld [vmem:[%s523 + $0x8] sm:$0xff]
          %v620 = vld [vmem:[#allocation7] sm:$0x1]
          %v621 = vld [vmem:[#allocation9] sm:$0x1]
          %vm622 = vcmask 261120
          %v623 = vsel %vm622, %v618, 0.0
          %624 = vadd.xlane.f32.xlu0 %v623
          %v625 = vpop.xlane.xlu0 %624
          %v626 = vsel %vm622, %v619, 0.0
          %627 = vadd.xlane.f32.xlu0 %v626
          %v628 = vpop.xlane.xlu0 %627
          %v629 = vrcp.pop 32.0
          %v630 = vmul.f32 32.0, %v629
          %v631 = vsub.f32 1.0, %v630
          %v632 = vmul.f32 %v629, %v631
          %v633 = vadd.f32 %v629, %v632
          %vm634 = vweird.f32 %v629
          %v635 = vsel %vm634, %v629, %v633
          %v636 = vmul.f32 %v625, %v635
          %v637 = vmul.f32 %v628, %v635
          %v638 = vsub.f32 %v618, %v636
          %v639 = vsub.f32 %v619, %v637
          %v640 = vmul.f32 %v638, %v638
          %v641 = vmul.f32 %v639, %v639
          %v642 = vsel %vm622, %v640, 0.0
          %643 = vadd.xlane.f32.xlu0 %v642
          %v644 = vpop.xlane.xlu0 %643
          %v645 = vsel %vm622, %v641, 0.0
          %646 = vadd.xlane.f32.xlu0 %v645
          %v647 = vpop.xlane.xlu0 %646
          %v648 = vmul.f32 %v644, %v635
          %v649 = vmul.f32 %v647, %v635
          %v650 = vadd.f32 %v648, 1e-05
          %v651 = vadd.f32 %v649, 1e-05
          %v652 = vrsqrt.pop %v650
          %v653 = vmul.f32 %v652, %v650
          %v654 = vmul.f32 %v653, %v652
          %v655 = vmul.f32 0.5, %v654
          %v656 = vsub.f32 1.5, %v655
          %v657 = vmul.f32 %v652, %v656
          %vm658 = vweird.f32 %v650
          %vm659 = vweird.f32 %v652
          %vm660 = vmor %vm658, %vm659
          %v661 = vsel %vm660, %v652, %v657
          %v662 = vrsqrt.pop %v651
          %v663 = vmul.f32 %v662, %v651
          %v664 = vmul.f32 %v663, %v662
          %v665 = vmul.f32 0.5, %v664
          %v666 = vsub.f32 1.5, %v665
          %v667 = vmul.f32 %v662, %v666
          %vm668 = vweird.f32 %v651
          %vm669 = vweird.f32 %v662
          %vm670 = vmor %vm668, %vm669
          %v671 = vsel %vm670, %v662, %v667
          %v672 = vmul.f32 %v638, %v661
          %v673 = vmul.f32 %v639, %v671
          %v675 = vperm.slane %v620, 0
          %v677 = vmul.f32 %v672, %v675
          %v678 = vmul.f32 %v673, %v675
          %v680 = vperm.slane %v621, 0
          %v682 = vadd.f32 %v677, %v680
          %v683 = vadd.f32 %v678, %v680
          %v684 = vpack.c.bf16 %v682, %v682
          %v685 = vpack.c.bf16 %v683, %v683
          %686 = vst.msk [vmem:[#allocation2 + $0x8] sm:$0xf] %vm613, %v684
          %687 = vst.msk [vmem:[#allocation2 + $0xc] sm:$0xf] %vm613, %v685
          %v688 = vld [vmem:[#allocation2 + $0x4] sm:$0x8]
          %v689 = vld [vmem:[#allocation2 + $0x8] sm:$0xf]
          %v690 = vld [vmem:[#allocation2 + $0xc] sm:$0xf]
          %v691 = vld [vmem:[#allocation10] sm:$0xf]
          %v692 = vld [vmem:[#allocation10 + $0x4] sm:$0xf]
          %v693 = vld [vmem:[#allocation10 + $0x8] sm:$0xf]
          %v694 = vld [vmem:[#allocation10 + $0xc] sm:$0xf]
          %v695 = vld [vmem:[#allocation12] sm:$0xf]
          %v696 = vld [vmem:[#allocation12 + $0x4] sm:$0xf]
          %v697 = vld [vmem:[#allocation12 + $0x8] sm:$0xf]
          %v698 = vld [vmem:[#allocation12 + $0xc] sm:$0xf]
          %s699 = scalar_lea.vmem [#allocation10], 16
          %v700 = vld [vmem:[%s699] sm:$0xf]
          %v701 = vld [vmem:[%s699 + $0x4] sm:$0xf]
          %v702 = vld [vmem:[%s699 + $0x8] sm:$0xf]
          %v703 = vld [vmem:[%s699 + $0xc] sm:$0xf]
          %v706 = vunpack.c.l.b16 %v689
          %v707 = vunpack.c.l.b16 %v690
          %v708 = vpack.c.b16 %v707, %v706
          %v713 = vunpack.c.l.b16 %v700
          %v714 = vunpack.c.l.b16 %v701
          %v715 = vunpack.c.l.b16 %v702
          %v716 = vunpack.c.l.b16 %v703
          %v717 = vpack.c.b16 %v714, %v713
          %v718 = vpack.c.b16 %v716, %v715
          %v722 = vsel %vm622, %v708, 0
          %724 = vmatpush.bf16.msra.mxu0 0
          %725 = vmatpush.bf16.msra.mxu0 0
          %726 = vmatpush.bf16.msra.mxu0 0
          %727 = vmatpush.bf16.msra.mxu0 0
          %728 = vmatpush.bf16.msra.mxu0 0
          %729 = vmatpush.bf16.msra.mxu0 0
          %730 = vmatpush.bf16.msra.mxu0 %v718
          %731 = vmatpush.bf16.msra.mxu0 %v717
          %732 = vmatmul.bf16.gmra.mxu0 %v722
          %v733 = vpop.f32.mrf.mxu0
          %v734 = vadd.f32 0.0, %v733
          %v735 = vpop.f32.mrf.mxu0
          %v736 = vadd.f32 0.0, %v735
          %737 = vdwg.mxu0
          %s738 = scalar_lea.vmem [#allocation12], 16
          %v739 = vld [vmem:[%s738] sm:$0xf]
          %v740 = vld [vmem:[%s738 + $0x4] sm:$0xf]
          %v741 = vld [vmem:[%s738 + $0x8] sm:$0xf]
          %v742 = vld [vmem:[%s738 + $0xc] sm:$0xf]
          %v747 = vunpack.c.l.b16 %v739
          %v748 = vunpack.c.l.b16 %v740
          %v749 = vunpack.c.l.b16 %v741
          %v750 = vunpack.c.l.b16 %v742
          %v751 = vpack.c.b16 %v748, %v747
          %v752 = vpack.c.b16 %v750, %v749
          %755 = vmatpush.bf16.msra.mxu0 0
          %756 = vmatpush.bf16.msra.mxu0 0
          %757 = vmatpush.bf16.msra.mxu0 0
          %758 = vmatpush.bf16.msra.mxu0 0
          %759 = vmatpush.bf16.msra.mxu0 0
          %760 = vmatpush.bf16.msra.mxu0 0
          %761 = vmatpush.bf16.msra.mxu0 %v752
          %762 = vmatpush.bf16.msra.mxu0 %v751
          %763 = vmatmul.bf16.gmra.mxu0 %v722
          %v764 = vpop.f32.mrf.mxu0
          %v765 = vadd.f32 0.0, %v764
          %v766 = vpop.f32.mrf.mxu0
          %v767 = vadd.f32 0.0, %v766
          %768 = vdwg.mxu0
          %v770 = vunpack.c.l.b16 %v688
          %v771 = vpack.c.b16 %v706, %v770
          %v772 = vpack.c.b16 %v707, %v707
          %vm773 = vsmask.f32 4352
          %v775 = vshrl.u32 %v771, 16
          %v777 = vrot.slane %v775, 3
          %v778 = vshll.u32 %v771, 16
          %v780 = vrot.slane %v778, 4
          %v781 = vor.u32 %v777, %v780
          %v783 = vshrl.u32 %v772, 16
          %v785 = vrot.slane %v783, 3
          %v786 = vshll.u32 %v772, 16
          %v788 = vrot.slane %v786, 4
          %v789 = vor.u32 %v785, %v788
          %v790 = vsel %vm773, %v781, %v789
          %v795 = vunpack.c.l.b16 %v691
          %v796 = vunpack.c.l.b16 %v692
          %v797 = vunpack.c.l.b16 %v693
          %v798 = vunpack.c.l.b16 %v694
          %v799 = vpack.c.b16 %v796, %v795
          %v800 = vpack.c.b16 %v798, %v797
          %v804 = vsel %vm622, %v790, 0
          %806 = vmatpush.bf16.msra.mxu0 0
          %807 = vmatpush.bf16.msra.mxu0 0
          %808 = vmatpush.bf16.msra.mxu0 0
          %809 = vmatpush.bf16.msra.mxu0 0
          %810 = vmatpush.bf16.msra.mxu0 0
          %811 = vmatpush.bf16.msra.mxu0 0
          %812 = vmatpush.bf16.msra.mxu0 %v800
          %813 = vmatpush.bf16.msra.mxu0 %v799
          %814 = vmatmul.bf16.gmra.mxu0 %v804
          %v815 = vpop.f32.mrf.mxu0
          %v816 = vadd.f32 %v734, %v815
          %v817 = vpop.f32.mrf.mxu0
          %v818 = vadd.f32 %v736, %v817
          %819 = vdwg.mxu0
          %v824 = vunpack.c.l.b16 %v695
          %v825 = vunpack.c.l.b16 %v696
          %v826 = vunpack.c.l.b16 %v697
          %v827 = vunpack.c.l.b16 %v698
          %v828 = vpack.c.b16 %v825, %v824
          %v829 = vpack.c.b16 %v827, %v826
          %832 = vmatpush.bf16.msra.mxu0 0
          %833 = vmatpush.bf16.msra.mxu0 0
          %834 = vmatpush.bf16.msra.mxu0 0
          %835 = vmatpush.bf16.msra.mxu0 0
          %836 = vmatpush.bf16.msra.mxu0 0
          %837 = vmatpush.bf16.msra.mxu0 0
          %838 = vmatpush.bf16.msra.mxu0 %v829
          %839 = vmatpush.bf16.msra.mxu0 %v828
          %840 = vmatmul.bf16.gmra.mxu0 %v804
          %v841 = vpop.f32.mrf.mxu0
          %v842 = vadd.f32 %v765, %v841
          %v843 = vpop.f32.mrf.mxu0
          %v844 = vadd.f32 %v767, %v843
          %845 = vdwg.mxu0
          %v846 = vld [vmem:[#allocation2 + $0x8] sm:$0xf]
          %v847 = vld [vmem:[#allocation2 + $0xc] sm:$0xf]
          %v848 = vld [vmem:[#allocation2 + $0x10] sm:$0x1]
          %s849 = scalar_lea.vmem [#allocation10], 32
          %v850 = vld [vmem:[%s849] sm:$0xf]
          %v851 = vld [vmem:[%s849 + $0x4] sm:$0xf]
          %v852 = vld [vmem:[%s849 + $0x8] sm:$0xf]
          %v853 = vld [vmem:[%s849 + $0xc] sm:$0xf]
          %v857 = vunpack.c.l.b16 %v846
          %v858 = vunpack.c.l.b16 %v847
          %v859 = vunpack.c.l.b16 %v848
          %v860 = vpack.c.b16 %v858, %v857
          %v861 = vpack.c.b16 %v859, %v859
          %vm862 = vsmask.f32 7424
          %v864 = vshrl.u32 %v860, 16
          %v866 = vshll.u32 %v860, 16
          %v868 = vrot.slane %v866, 1
          %v869 = vor.u32 %v864, %v868
          %v871 = vshll.u32 %v861, 16
          %v873 = vrot.slane %v871, 1
          %v874 = vsel %vm862, %v869, %v873
          %v879 = vunpack.c.l.b16 %v850
          %v880 = vunpack.c.l.b16 %v851
          %v881 = vunpack.c.l.b16 %v852
          %v882 = vunpack.c.l.b16 %v853
          %v883 = vpack.c.b16 %v880, %v879
          %v884 = vpack.c.b16 %v882, %v881
          %v888 = vsel %vm622, %v874, 0
          %890 = vmatpush.bf16.msra.mxu0 0
          %891 = vmatpush.bf16.msra.mxu0 0
          %892 = vmatpush.bf16.msra.mxu0 0
          %893 = vmatpush.bf16.msra.mxu0 0
          %894 = vmatpush.bf16.msra.mxu0 0
          %895 = vmatpush.bf16.msra.mxu0 0
          %896 = vmatpush.bf16.msra.mxu0 %v884
          %897 = vmatpush.bf16.msra.mxu0 %v883
          %898 = vmatmul.bf16.gmra.mxu0 %v888
          %v899 = vpop.f32.mrf.mxu0
          %v900 = vadd.f32 0.0, %v899
          %v901 = vpop.f32.mrf.mxu0
          %v902 = vadd.f32 0.0, %v901
          %903 = vdwg.mxu0
          %s904 = scalar_lea.vmem [#allocation12], 32
          %v905 = vld [vmem:[%s904] sm:$0xf]
          %v906 = vld [vmem:[%s904 + $0x4] sm:$0xf]
          %v907 = vld [vmem:[%s904 + $0x8] sm:$0xf]
          %v908 = vld [vmem:[%s904 + $0xc] sm:$0xf]
          %v913 = vunpack.c.l.b16 %v905
          %v914 = vunpack.c.l.b16 %v906
          %v915 = vunpack.c.l.b16 %v907
          %v916 = vunpack.c.l.b16 %v908
          %v917 = vpack.c.b16 %v914, %v913
          %v918 = vpack.c.b16 %v916, %v915
          %921 = vmatpush.bf16.msra.mxu0 0
          %922 = vmatpush.bf16.msra.mxu0 0
          %923 = vmatpush.bf16.msra.mxu0 0
          %924 = vmatpush.bf16.msra.mxu0 0
          %925 = vmatpush.bf16.msra.mxu0 0
          %926 = vmatpush.bf16.msra.mxu0 0
          %927 = vmatpush.bf16.msra.mxu0 %v918
          %928 = vmatpush.bf16.msra.mxu0 %v917
          %929 = vmatmul.bf16.gmra.mxu0 %v888
          %v930 = vpop.f32.mrf.mxu0
          %v931 = vadd.f32 0.0, %v930
          %v932 = vpop.f32.mrf.mxu0
          %v933 = vadd.f32 0.0, %v932
          %934 = vdwg.mxu0
          %v935 = vadd.f32 %v816, %v900
          %v936 = vadd.f32 %v818, %v902
          %v937 = vadd.f32 %v842, %v931
          %v938 = vadd.f32 %v844, %v933
          %v939 = vld [vmem:[%s5] sm:$0x1]
          %v941 = vperm.slane %v939, 0
          %v943 = vadd.f32 %v935, %v941
          %v944 = vadd.f32 %v936, %v941
          %v945 = vld [vmem:[#allocation13] sm:$0x1]
          %v947 = vperm.slane %v945, 0
          %v949 = vadd.f32 %v937, %v947
          %v950 = vadd.f32 %v938, %v947
          %v951 = vxor.u32 %v949, 2147483648
          %v952 = vxor.u32 %v950, 2147483648
          %v953 = vmul.f32 %v951, 1.442695
          %v954 = vpow.pop %v953
          %v955 = vmul.f32 %v952, 1.442695
          %v956 = vpow.pop %v955
          %v957 = vadd.f32 %v954, 1.0
          %v958 = vadd.f32 %v956, 1.0
          %v959 = vrcp.pop %v957
          %v960 = vmul.f32 %v957, %v959
          %v961 = vsub.f32 1.0, %v960
          %v962 = vmul.f32 %v959, %v961
          %v963 = vadd.f32 %v959, %v962
          %vm964 = vweird.f32 %v957
          %vm965 = vweird.f32 %v959
          %vm966 = vmor %vm964, %vm965
          %v967 = vsel %vm966, %v959, %v963
          %v968 = vand.u32 2147483647, %v957
          %vm969 = vcmp.eq.f32.partialorder %v968, 8.507059e+37
          %v970 = vand.u32 %v957, 2147483648
          %v971 = vor.u32 1.1754944e-38, %v970
          %v972 = vsel %vm969, %v971, %v967
          %v973 = vmul.f32 1.0, %v972
          %v974 = vrcp.pop %v958
          %v975 = vmul.f32 %v958, %v974
          %v976 = vsub.f32 1.0, %v975
          %v977 = vmul.f32 %v974, %v976
          %v978 = vadd.f32 %v974, %v977
          %vm979 = vweird.f32 %v958
          %vm980 = vweird.f32 %v974
          %vm981 = vmor %vm979, %vm980
          %v982 = vsel %vm981, %v974, %v978
          %v983 = vand.u32 2147483647, %v958
          %vm984 = vcmp.eq.f32.partialorder %v983, 8.507059e+37
          %v985 = vand.u32 %v958, 2147483648
          %v986 = vor.u32 1.1754944e-38, %v985
          %v987 = vsel %vm984, %v986, %v982
          %v988 = vmul.f32 1.0, %v987
          %v989 = vmul.f32 %v943, %v973
          %v990 = vmul.f32 %v944, %v988
          %v991 = vadd.f32 %v989, %v682
          %v992 = vadd.f32 %v990, %v683
          %v993 = vld [vmem:[%s7] sm:$0x1]
          %v994 = vld [vmem:[#allocation15] sm:$0x1]
          %v995 = vsel %vm622, %v991, 0.0
          %996 = vadd.xlane.f32.xlu0 %v995
          %v997 = vpop.xlane.xlu0 %996
          %v998 = vsel %vm622, %v992, 0.0
          %999 = vadd.xlane.f32.xlu0 %v998
          %v1000 = vpop.xlane.xlu0 %999
          %v1001 = vmul.f32 %v997, %v635
          %v1002 = vmul.f32 %v1000, %v635
          %v1003 = vsub.f32 %v991, %v1001
          %v1004 = vsub.f32 %v992, %v1002
          %v1005 = vmul.f32 %v1003, %v1003
          %v1006 = vmul.f32 %v1004, %v1004
          %v1007 = vsel %vm622, %v1005, 0.0
          %1008 = vadd.xlane.f32.xlu0 %v1007
          %v1009 = vpop.xlane.xlu0 %1008
          %v1010 = vsel %vm622, %v1006, 0.0
          %1011 = vadd.xlane.f32.xlu0 %v1010
          %v1012 = vpop.xlane.xlu0 %1011
          %v1013 = vmul.f32 %v1009, %v635
          %v1014 = vmul.f32 %v1012, %v635
          %v1015 = vadd.f32 %v1013, 1e-05
          %v1016 = vadd.f32 %v1014, 1e-05
          %v1017 = vrsqrt.pop %v1015
          %v1018 = vmul.f32 %v1017, %v1015
          %v1019 = vmul.f32 %v1018, %v1017
          %v1020 = vmul.f32 0.5, %v1019
          %v1021 = vsub.f32 1.5, %v1020
          %v1022 = vmul.f32 %v1017, %v1021
          %vm1023 = vweird.f32 %v1015
          %vm1024 = vweird.f32 %v1017
          %vm1025 = vmor %vm1023, %vm1024
          %v1026 = vsel %vm1025, %v1017, %v1022
          %v1027 = vrsqrt.pop %v1016
          %v1028 = vmul.f32 %v1027, %v1016
          %v1029 = vmul.f32 %v1028, %v1027
          %v1030 = vmul.f32 0.5, %v1029
          %v1031 = vsub.f32 1.5, %v1030
          %v1032 = vmul.f32 %v1027, %v1031
          %vm1033 = vweird.f32 %v1016
          %vm1034 = vweird.f32 %v1027
          %vm1035 = vmor %vm1033, %vm1034
          %v1036 = vsel %vm1035, %v1027, %v1032
          %v1037 = vmul.f32 %v1003, %v1026
          %v1038 = vmul.f32 %v1004, %v1036
          %v1040 = vperm.slane %v993, 0
          %v1042 = vmul.f32 %v1037, %v1040
          %v1043 = vmul.f32 %v1038, %v1040
          %v1045 = vperm.slane %v994, 0
          %v1047 = vadd.f32 %v1042, %v1045
          %v1048 = vadd.f32 %v1043, %v1045
          %v1049 = vpack.c.bf16 %v1047, %v1047
          %v1050 = vpack.c.bf16 %v1048, %v1048
          %1051 = vst.msk [vmem:[#allocation2 + $0x8] sm:$0xf] %vm613, %v1049
          %1052 = vst.msk [vmem:[#allocation2 + $0xc] sm:$0xf] %vm613, %v1050
          %v1053 = vld [vmem:[#allocation2 + $0x4] sm:$0x8]
          %v1054 = vld [vmem:[#allocation2 + $0x8] sm:$0xf]
          %v1055 = vld [vmem:[#allocation2 + $0xc] sm:$0xf]
          %s1056 = scalar_lea.vmem [#allocation10], 48
          %v1057 = vld [vmem:[%s1056] sm:$0xf]
          %v1058 = vld [vmem:[%s1056 + $0x4] sm:$0xf]
          %v1059 = vld [vmem:[%s1056 + $0x8] sm:$0xf]
          %v1060 = vld [vmem:[%s1056 + $0xc] sm:$0xf]
          %s1061 = scalar_lea.vmem [#allocation12], 48
          %v1062 = vld [vmem:[%s1061] sm:$0xf]
          %v1063 = vld [vmem:[%s1061 + $0x4] sm:$0xf]
          %v1064 = vld [vmem:[%s1061 + $0x8] sm:$0xf]
          %v1065 = vld [vmem:[%s1061 + $0xc] sm:$0xf]
          %s1066 = scalar_lea.vmem [#allocation10], 64
          %v1067 = vld [vmem:[%s1066] sm:$0xf]
          %v1068 = vld [vmem:[%s1066 + $0x4] sm:$0xf]
          %v1069 = vld [vmem:[%s1066 + $0x8] sm:$0xf]
          %v1070 = vld [vmem:[%s1066 + $0xc] sm:$0xf]
          %v1073 = vunpack.c.l.b16 %v1054
          %v1074 = vunpack.c.l.b16 %v1055
          %v1075 = vpack.c.b16 %v1074, %v1073
          %v1080 = vunpack.c.l.b16 %v1067
          %v1081 = vunpack.c.l.b16 %v1068
          %v1082 = vunpack.c.l.b16 %v1069
          %v1083 = vunpack.c.l.b16 %v1070
          %v1084 = vpack.c.b16 %v1081, %v1080
          %v1085 = vpack.c.b16 %v1083, %v1082
          %v1089 = vsel %vm622, %v1075, 0
          %1091 = vmatpush.bf16.msra.mxu0 0
          %1092 = vmatpush.bf16.msra.mxu0 0
          %1093 = vmatpush.bf16.msra.mxu0 0
          %1094 = vmatpush.bf16.msra.mxu0 0
          %1095 = vmatpush.bf16.msra.mxu0 0
          %1096 = vmatpush.bf16.msra.mxu0 0
          %1097 = vmatpush.bf16.msra.mxu0 %v1085
          %1098 = vmatpush.bf16.msra.mxu0 %v1084
          %1099 = vmatmul.bf16.gmra.mxu0 %v1089
          %v1100 = vpop.f32.mrf.mxu0
          %v1101 = vadd.f32 0.0, %v1100
          %v1102 = vpop.f32.mrf.mxu0
          %v1103 = vadd.f32 0.0, %v1102
          %1104 = vdwg.mxu0
          %s1105 = scalar_lea.vmem [#allocation12], 64
          %v1106 = vld [vmem:[%s1105] sm:$0xf]
          %v1107 = vld [vmem:[%s1105 + $0x4] sm:$0xf]
          %v1108 = vld [vmem:[%s1105 + $0x8] sm:$0xf]
          %v1109 = vld [vmem:[%s1105 + $0xc] sm:$0xf]
          %v1114 = vunpack.c.l.b16 %v1106
          %v1115 = vunpack.c.l.b16 %v1107
          %v1116 = vunpack.c.l.b16 %v1108
          %v1117 = vunpack.c.l.b16 %v1109
          %v1118 = vpack.c.b16 %v1115, %v1114
          %v1119 = vpack.c.b16 %v1117, %v1116
          %1122 = vmatpush.bf16.msra.mxu0 0
          %1123 = vmatpush.bf16.msra.mxu0 0
          %1124 = vmatpush.bf16.msra.mxu0 0
          %1125 = vmatpush.bf16.msra.mxu0 0
          %1126 = vmatpush.bf16.msra.mxu0 0
          %1127 = vmatpush.bf16.msra.mxu0 0
          %1128 = vmatpush.bf16.msra.mxu0 %v1119
          %1129 = vmatpush.bf16.msra.mxu0 %v1118
          %1130 = vmatmul.bf16.gmra.mxu0 %v1089
          %v1131 = vpop.f32.mrf.mxu0
          %v1132 = vadd.f32 0.0, %v1131
          %v1133 = vpop.f32.mrf.mxu0
          %v1134 = vadd.f32 0.0, %v1133
          %1135 = vdwg.mxu0
          %v1137 = vunpack.c.l.b16 %v1053
          %v1138 = vpack.c.b16 %v1073, %v1137
          %v1139 = vpack.c.b16 %v1074, %v1074
          %v1141 = vshrl.u32 %v1138, 16
          %v1143 = vrot.slane %v1141, 3
          %v1144 = vshll.u32 %v1138, 16
          %v1146 = vrot.slane %v1144, 4
          %v1147 = vor.u32 %v1143, %v1146
          %v1149 = vshrl.u32 %v1139, 16
          %v1151 = vrot.slane %v1149, 3
          %v1152 = vshll.u32 %v1139, 16
          %v1154 = vrot.slane %v1152, 4
          %v1155 = vor.u32 %v1151, %v1154
          %v1156 = vsel %vm773, %v1147, %v1155
          %v1161 = vunpack.c.l.b16 %v1057
          %v1162 = vunpack.c.l.b16 %v1058
          %v1163 = vunpack.c.l.b16 %v1059
          %v1164 = vunpack.c.l.b16 %v1060
          %v1165 = vpack.c.b16 %v1162, %v1161
          %v1166 = vpack.c.b16 %v1164, %v1163
          %v1170 = vsel %vm622, %v1156, 0
          %1172 = vmatpush.bf16.msra.mxu0 0
          %1173 = vmatpush.bf16.msra.mxu0 0
          %1174 = vmatpush.bf16.msra.mxu0 0
          %1175 = vmatpush.bf16.msra.mxu0 0
          %1176 = vmatpush.bf16.msra.mxu0 0
          %1177 = vmatpush.bf16.msra.mxu0 0
          %1178 = vmatpush.bf16.msra.mxu0 %v1166
          %1179 = vmatpush.bf16.msra.mxu0 %v1165
          %1180 = vmatmul.bf16.gmra.mxu0 %v1170
          %v1181 = vpop.f32.mrf.mxu0
          %v1182 = vadd.f32 %v1101, %v1181
          %v1183 = vpop.f32.mrf.mxu0
          %v1184 = vadd.f32 %v1103, %v1183
          %1185 = vdwg.mxu0
          %v1190 = vunpack.c.l.b16 %v1062
          %v1191 = vunpack.c.l.b16 %v1063
          %v1192 = vunpack.c.l.b16 %v1064
          %v1193 = vunpack.c.l.b16 %v1065
          %v1194 = vpack.c.b16 %v1191, %v1190
          %v1195 = vpack.c.b16 %v1193, %v1192
          %1198 = vmatpush.bf16.msra.mxu0 0
          %1199 = vmatpush.bf16.msra.mxu0 0
          %1200 = vmatpush.bf16.msra.mxu0 0
          %1201 = vmatpush.bf16.msra.mxu0 0
          %1202 = vmatpush.bf16.msra.mxu0 0
          %1203 = vmatpush.bf16.msra.mxu0 0
          %1204 = vmatpush.bf16.msra.mxu0 %v1195
          %1205 = vmatpush.bf16.msra.mxu0 %v1194
          %1206 = vmatmul.bf16.gmra.mxu0 %v1170
          %v1207 = vpop.f32.mrf.mxu0
          %v1208 = vadd.f32 %v1132, %v1207
          %v1209 = vpop.f32.mrf.mxu0
          %v1210 = vadd.f32 %v1134, %v1209
          %1211 = vdwg.mxu0
          %v1212 = vld [vmem:[#allocation2 + $0x8] sm:$0xf]
          %v1213 = vld [vmem:[#allocation2 + $0xc] sm:$0xf]
          %v1214 = vld [vmem:[#allocation2 + $0x10] sm:$0x1]
          %s1215 = scalar_lea.vmem [#allocation10], 80
          %v1216 = vld [vmem:[%s1215] sm:$0xf]
          %v1217 = vld [vmem:[%s1215 + $0x4] sm:$0xf]
          %v1218 = vld [vmem:[%s1215 + $0x8] sm:$0xf]
          %v1219 = vld [vmem:[%s1215 + $0xc] sm:$0xf]
          %v1223 = vunpack.c.l.b16 %v1212
          %v1224 = vunpack.c.l.b16 %v1213
          %v1225 = vunpack.c.l.b16 %v1214
          %v1226 = vpack.c.b16 %v1224, %v1223
          %v1227 = vpack.c.b16 %v1225, %v1225
          %v1229 = vshrl.u32 %v1226, 16
          %v1231 = vshll.u32 %v1226, 16
          %v1233 = vrot.slane %v1231, 1
          %v1234 = vor.u32 %v1229, %v1233
          %v1236 = vshll.u32 %v1227, 16
          %v1238 = vrot.slane %v1236, 1
          %v1239 = vsel %vm862, %v1234, %v1238
          %v1244 = vunpack.c.l.b16 %v1216
          %v1245 = vunpack.c.l.b16 %v1217
          %v1246 = vunpack.c.l.b16 %v1218
          %v1247 = vunpack.c.l.b16 %v1219
          %v1248 = vpack.c.b16 %v1245, %v1244
          %v1249 = vpack.c.b16 %v1247, %v1246
          %v1253 = vsel %vm622, %v1239, 0
          %1255 = vmatpush.bf16.msra.mxu0 0
          %1256 = vmatpush.bf16.msra.mxu0 0
          %1257 = vmatpush.bf16.msra.mxu0 0
          %1258 = vmatpush.bf16.msra.mxu0 0
          %1259 = vmatpush.bf16.msra.mxu0 0
          %1260 = vmatpush.bf16.msra.mxu0 0
          %1261 = vmatpush.bf16.msra.mxu0 %v1249
          %1262 = vmatpush.bf16.msra.mxu0 %v1248
          %1263 = vmatmul.bf16.gmra.mxu0 %v1253
          %v1264 = vpop.f32.mrf.mxu0
          %v1265 = vadd.f32 0.0, %v1264
          %v1266 = vpop.f32.mrf.mxu0
          %v1267 = vadd.f32 0.0, %v1266
          %1268 = vdwg.mxu0
          %s1269 = scalar_lea.vmem [#allocation12], 80
          %v1270 = vld [vmem:[%s1269] sm:$0xf]
          %v1271 = vld [vmem:[%s1269 + $0x4] sm:$0xf]
          %v1272 = vld [vmem:[%s1269 + $0x8] sm:$0xf]
          %v1273 = vld [vmem:[%s1269 + $0xc] sm:$0xf]
          %v1278 = vunpack.c.l.b16 %v1270
          %v1279 = vunpack.c.l.b16 %v1271
          %v1280 = vunpack.c.l.b16 %v1272
          %v1281 = vunpack.c.l.b16 %v1273
          %v1282 = vpack.c.b16 %v1279, %v1278
          %v1283 = vpack.c.b16 %v1281, %v1280
          %1286 = vmatpush.bf16.msra.mxu0 0
          %1287 = vmatpush.bf16.msra.mxu0 0
          %1288 = vmatpush.bf16.msra.mxu0 0
          %1289 = vmatpush.bf16.msra.mxu0 0
          %1290 = vmatpush.bf16.msra.mxu0 0
          %1291 = vmatpush.bf16.msra.mxu0 0
          %1292 = vmatpush.bf16.msra.mxu0 %v1283
          %1293 = vmatpush.bf16.msra.mxu0 %v1282
          %1294 = vmatmul.bf16.gmra.mxu0 %v1253
          %v1295 = vpop.f32.mrf.mxu0
          %v1296 = vadd.f32 0.0, %v1295
          %v1297 = vpop.f32.mrf.mxu0
          %v1298 = vadd.f32 0.0, %v1297
          %1299 = vdwg.mxu0
          %v1300 = vadd.f32 %v1182, %v1265
          %v1301 = vadd.f32 %v1184, %v1267
          %v1302 = vadd.f32 %v1208, %v1296
          %v1303 = vadd.f32 %v1210, %v1298
          %s1304 = scalar_lea.vmem %s5, 1
          %v1305 = vld [vmem:[%s1304] sm:$0x1]
          %v1307 = vperm.slane %v1305, 0
          %v1309 = vadd.f32 %v1300, %v1307
          %v1310 = vadd.f32 %v1301, %v1307
          %s1311 = scalar_lea.vmem [#allocation13], 1
          %v1312 = vld [vmem:[%s1311] sm:$0x1]
          %v1314 = vperm.slane %v1312, 0
          %v1316 = vadd.f32 %v1302, %v1314
          %v1317 = vadd.f32 %v1303, %v1314
          %v1318 = vxor.u32 %v1316, 2147483648
          %v1319 = vxor.u32 %v1317, 2147483648
          %v1320 = vmul.f32 %v1318, 1.442695
          %v1321 = vpow.pop %v1320
          %v1322 = vmul.f32 %v1319, 1.442695
          %v1323 = vpow.pop %v1322
          %v1324 = vadd.f32 %v1321, 1.0
          %v1325 = vadd.f32 %v1323, 1.0
          %v1326 = vrcp.pop %v1324
          %v1327 = vmul.f32 %v1324, %v1326
          %v1328 = vsub.f32 1.0, %v1327
          %v1329 = vmul.f32 %v1326, %v1328
          %v1330 = vadd.f32 %v1326, %v1329
          %vm1331 = vweird.f32 %v1324
          %vm1332 = vweird.f32 %v1326
          %vm1333 = vmor %vm1331, %vm1332
          %v1334 = vsel %vm1333, %v1326, %v1330
          %v1335 = vand.u32 2147483647, %v1324
          %vm1336 = vcmp.eq.f32.partialorder %v1335, 8.507059e+37
          %v1337 = vand.u32 %v1324, 2147483648
          %v1338 = vor.u32 1.1754944e-38, %v1337
          %v1339 = vsel %vm1336, %v1338, %v1334
          %v1340 = vmul.f32 1.0, %v1339
          %v1341 = vrcp.pop %v1325
          %v1342 = vmul.f32 %v1325, %v1341
          %v1343 = vsub.f32 1.0, %v1342
          %v1344 = vmul.f32 %v1341, %v1343
          %v1345 = vadd.f32 %v1341, %v1344
          %vm1346 = vweird.f32 %v1325
          %vm1347 = vweird.f32 %v1341
          %vm1348 = vmor %vm1346, %vm1347
          %v1349 = vsel %vm1348, %v1341, %v1345
          %v1350 = vand.u32 2147483647, %v1325
          %vm1351 = vcmp.eq.f32.partialorder %v1350, 8.507059e+37
          %v1352 = vand.u32 %v1325, 2147483648
          %v1353 = vor.u32 1.1754944e-38, %v1352
          %v1354 = vsel %vm1351, %v1353, %v1349
          %v1355 = vmul.f32 1.0, %v1354
          %v1356 = vmul.f32 %v1309, %v1340
          %v1357 = vmul.f32 %v1310, %v1355
          %v1358 = vadd.f32 %v1356, %v1047
          %v1359 = vadd.f32 %v1357, %v1048
          %s1360 = scalar_lea.vmem %s7, 1
          %v1361 = vld [vmem:[%s1360] sm:$0x1]
          %s1362 = scalar_lea.vmem [#allocation15], 1
          %v1363 = vld [vmem:[%s1362] sm:$0x1]
          %v1364 = vsel %vm622, %v1358, 0.0
          %1365 = vadd.xlane.f32.xlu0 %v1364
          %v1366 = vpop.xlane.xlu0 %1365
          %v1367 = vsel %vm622, %v1359, 0.0
          %1368 = vadd.xlane.f32.xlu0 %v1367
          %v1369 = vpop.xlane.xlu0 %1368
          %v1370 = vmul.f32 %v1366, %v635
          %v1371 = vmul.f32 %v1369, %v635
          %v1372 = vsub.f32 %v1358, %v1370
          %v1373 = vsub.f32 %v1359, %v1371
          %v1374 = vmul.f32 %v1372, %v1372
          %v1375 = vmul.f32 %v1373, %v1373
          %v1376 = vsel %vm622, %v1374, 0.0
          %1377 = vadd.xlane.f32.xlu0 %v1376
          %v1378 = vpop.xlane.xlu0 %1377
          %v1379 = vsel %vm622, %v1375, 0.0
          %1380 = vadd.xlane.f32.xlu0 %v1379
          %v1381 = vpop.xlane.xlu0 %1380
          %v1382 = vmul.f32 %v1378, %v635
          %v1383 = vmul.f32 %v1381, %v635
          %v1384 = vadd.f32 %v1382, 1e-05
          %v1385 = vadd.f32 %v1383, 1e-05
          %v1386 = vrsqrt.pop %v1384
          %v1387 = vmul.f32 %v1386, %v1384
          %v1388 = vmul.f32 %v1387, %v1386
          %v1389 = vmul.f32 0.5, %v1388
          %v1390 = vsub.f32 1.5, %v1389
          %v1391 = vmul.f32 %v1386, %v1390
          %vm1392 = vweird.f32 %v1384
          %vm1393 = vweird.f32 %v1386
          %vm1394 = vmor %vm1392, %vm1393
          %v1395 = vsel %vm1394, %v1386, %v1391
          %v1396 = vrsqrt.pop %v1385
          %v1397 = vmul.f32 %v1396, %v1385
          %v1398 = vmul.f32 %v1397, %v1396
          %v1399 = vmul.f32 0.5, %v1398
          %v1400 = vsub.f32 1.5, %v1399
          %v1401 = vmul.f32 %v1396, %v1400
          %vm1402 = vweird.f32 %v1385
          %vm1403 = vweird.f32 %v1396
          %vm1404 = vmor %vm1402, %vm1403
          %v1405 = vsel %vm1404, %v1396, %v1401
          %v1406 = vmul.f32 %v1372, %v1395
          %v1407 = vmul.f32 %v1373, %v1405
          %v1409 = vperm.slane %v1361, 0
          %v1411 = vmul.f32 %v1406, %v1409
          %v1412 = vmul.f32 %v1407, %v1409
          %v1414 = vperm.slane %v1363, 0
          %v1416 = vadd.f32 %v1411, %v1414
          %v1417 = vadd.f32 %v1412, %v1414
          %v1418 = vpack.c.bf16 %v1416, %v1416
          %v1419 = vpack.c.bf16 %v1417, %v1417
          %1420 = vst.msk [vmem:[#allocation2 + $0x8] sm:$0xf] %vm613, %v1418
          %1421 = vst.msk [vmem:[#allocation2 + $0xc] sm:$0xf] %vm613, %v1419
          %v1422 = vld [vmem:[#allocation2 + $0x4] sm:$0x8]
          %v1423 = vld [vmem:[#allocation2 + $0x8] sm:$0xf]
          %v1424 = vld [vmem:[#allocation2 + $0xc] sm:$0xf]
          %s1425 = scalar_lea.vmem [#allocation10], 96
          %v1426 = vld [vmem:[%s1425] sm:$0xf]
          %v1427 = vld [vmem:[%s1425 + $0x4] sm:$0xf]
          %v1428 = vld [vmem:[%s1425 + $0x8] sm:$0xf]
          %v1429 = vld [vmem:[%s1425 + $0xc] sm:$0xf]
          %s1430 = scalar_lea.vmem [#allocation12], 96
          %v1431 = vld [vmem:[%s1430] sm:$0xf]
          %v1432 = vld [vmem:[%s1430 + $0x4] sm:$0xf]
          %v1433 = vld [vmem:[%s1430 + $0x8] sm:$0xf]
          %v1434 = vld [vmem:[%s1430 + $0xc] sm:$0xf]
          %s1435 = scalar_lea.vmem [#allocation10], 112
          %v1436 = vld [vmem:[%s1435] sm:$0xf]
          %v1437 = vld [vmem:[%s1435 + $0x4] sm:$0xf]
          %v1438 = vld [vmem:[%s1435 + $0x8] sm:$0xf]
          %v1439 = vld [vmem:[%s1435 + $0xc] sm:$0xf]
          %v1442 = vunpack.c.l.b16 %v1423
          %v1443 = vunpack.c.l.b16 %v1424
          %v1444 = vpack.c.b16 %v1443, %v1442
          %v1449 = vunpack.c.l.b16 %v1436
          %v1450 = vunpack.c.l.b16 %v1437
          %v1451 = vunpack.c.l.b16 %v1438
          %v1452 = vunpack.c.l.b16 %v1439
          %v1453 = vpack.c.b16 %v1450, %v1449
          %v1454 = vpack.c.b16 %v1452, %v1451
          %v1458 = vsel %vm622, %v1444, 0
          %1460 = vmatpush.bf16.msra.mxu0 0
          %1461 = vmatpush.bf16.msra.mxu0 0
          %1462 = vmatpush.bf16.msra.mxu0 0
          %1463 = vmatpush.bf16.msra.mxu0 0
          %1464 = vmatpush.bf16.msra.mxu0 0
          %1465 = vmatpush.bf16.msra.mxu0 0
          %1466 = vmatpush.bf16.msra.mxu0 %v1454
          %1467 = vmatpush.bf16.msra.mxu0 %v1453
          %1468 = vmatmul.bf16.gmra.mxu0 %v1458
          %v1469 = vpop.f32.mrf.mxu0
          %v1470 = vadd.f32 0.0, %v1469
          %v1471 = vpop.f32.mrf.mxu0
          %v1472 = vadd.f32 0.0, %v1471
          %1473 = vdwg.mxu0
          %s1474 = scalar_lea.vmem [#allocation12], 112
          %v1475 = vld [vmem:[%s1474] sm:$0xf]
          %v1476 = vld [vmem:[%s1474 + $0x4] sm:$0xf]
          %v1477 = vld [vmem:[%s1474 + $0x8] sm:$0xf]
          %v1478 = vld [vmem:[%s1474 + $0xc] sm:$0xf]
          %v1483 = vunpack.c.l.b16 %v1475
          %v1484 = vunpack.c.l.b16 %v1476
          %v1485 = vunpack.c.l.b16 %v1477
          %v1486 = vunpack.c.l.b16 %v1478
          %v1487 = vpack.c.b16 %v1484, %v1483
          %v1488 = vpack.c.b16 %v1486, %v1485
          %1491 = vmatpush.bf16.msra.mxu0 0
          %1492 = vmatpush.bf16.msra.mxu0 0
          %1493 = vmatpush.bf16.msra.mxu0 0
          %1494 = vmatpush.bf16.msra.mxu0 0
          %1495 = vmatpush.bf16.msra.mxu0 0
          %1496 = vmatpush.bf16.msra.mxu0 0
          %1497 = vmatpush.bf16.msra.mxu0 %v1488
          %1498 = vmatpush.bf16.msra.mxu0 %v1487
          %1499 = vmatmul.bf16.gmra.mxu0 %v1458
          %v1500 = vpop.f32.mrf.mxu0
          %v1501 = vadd.f32 0.0, %v1500
          %v1502 = vpop.f32.mrf.mxu0
          %v1503 = vadd.f32 0.0, %v1502
          %1504 = vdwg.mxu0
          %v1506 = vunpack.c.l.b16 %v1422
          %v1507 = vpack.c.b16 %v1442, %v1506
          %v1508 = vpack.c.b16 %v1443, %v1443
          %v1510 = vshrl.u32 %v1507, 16
          %v1512 = vrot.slane %v1510, 3
          %v1513 = vshll.u32 %v1507, 16
          %v1515 = vrot.slane %v1513, 4
          %v1516 = vor.u32 %v1512, %v1515
          %v1518 = vshrl.u32 %v1508, 16
          %v1520 = vrot.slane %v1518, 3
          %v1521 = vshll.u32 %v1508, 16
          %v1523 = vrot.slane %v1521, 4
          %v1524 = vor.u32 %v1520, %v1523
          %v1525 = vsel %vm773, %v1516, %v1524
          %v1530 = vunpack.c.l.b16 %v1426
          %v1531 = vunpack.c.l.b16 %v1427
          %v1532 = vunpack.c.l.b16 %v1428
          %v1533 = vunpack.c.l.b16 %v1429
          %v1534 = vpack.c.b16 %v1531, %v1530
          %v1535 = vpack.c.b16 %v1533, %v1532
          %v1539 = vsel %vm622, %v1525, 0
          %1541 = vmatpush.bf16.msra.mxu0 0
          %1542 = vmatpush.bf16.msra.mxu0 0
          %1543 = vmatpush.bf16.msra.mxu0 0
          %1544 = vmatpush.bf16.msra.mxu0 0
          %1545 = vmatpush.bf16.msra.mxu0 0
          %1546 = vmatpush.bf16.msra.mxu0 0
          %1547 = vmatpush.bf16.msra.mxu0 %v1535
          %1548 = vmatpush.bf16.msra.mxu0 %v1534
          %1549 = vmatmul.bf16.gmra.mxu0 %v1539
          %v1550 = vpop.f32.mrf.mxu0
          %v1551 = vadd.f32 %v1470, %v1550
          %v1552 = vpop.f32.mrf.mxu0
          %v1553 = vadd.f32 %v1472, %v1552
          %1554 = vdwg.mxu0
          %v1559 = vunpack.c.l.b16 %v1431
          %v1560 = vunpack.c.l.b16 %v1432
          %v1561 = vunpack.c.l.b16 %v1433
          %v1562 = vunpack.c.l.b16 %v1434
          %v1563 = vpack.c.b16 %v1560, %v1559
          %v1564 = vpack.c.b16 %v1562, %v1561
          %1567 = vmatpush.bf16.msra.mxu0 0
          %1568 = vmatpush.bf16.msra.mxu0 0
          %1569 = vmatpush.bf16.msra.mxu0 0
          %1570 = vmatpush.bf16.msra.mxu0 0
          %1571 = vmatpush.bf16.msra.mxu0 0
          %1572 = vmatpush.bf16.msra.mxu0 0
          %1573 = vmatpush.bf16.msra.mxu0 %v1564
          %1574 = vmatpush.bf16.msra.mxu0 %v1563
          %1575 = vmatmul.bf16.gmra.mxu0 %v1539
          %v1576 = vpop.f32.mrf.mxu0
          %v1577 = vadd.f32 %v1501, %v1576
          %v1578 = vpop.f32.mrf.mxu0
          %v1579 = vadd.f32 %v1503, %v1578
          %1580 = vdwg.mxu0
          %v1581 = vld [vmem:[#allocation2 + $0x8] sm:$0xf]
          %v1582 = vld [vmem:[#allocation2 + $0xc] sm:$0xf]
          %v1583 = vld [vmem:[#allocation2 + $0x10] sm:$0x1]
          %s1584 = scalar_lea.vmem [#allocation10], 128
          %v1585 = vld [vmem:[%s1584] sm:$0xf]
          %v1586 = vld [vmem:[%s1584 + $0x4] sm:$0xf]
          %v1587 = vld [vmem:[%s1584 + $0x8] sm:$0xf]
          %v1588 = vld [vmem:[%s1584 + $0xc] sm:$0xf]
          %v1592 = vunpack.c.l.b16 %v1581
          %v1593 = vunpack.c.l.b16 %v1582
          %v1594 = vunpack.c.l.b16 %v1583
          %v1595 = vpack.c.b16 %v1593, %v1592
          %v1596 = vpack.c.b16 %v1594, %v1594
          %v1598 = vshrl.u32 %v1595, 16
          %v1600 = vshll.u32 %v1595, 16
          %v1602 = vrot.slane %v1600, 1
          %v1603 = vor.u32 %v1598, %v1602
          %v1605 = vshll.u32 %v1596, 16
          %v1607 = vrot.slane %v1605, 1
          %v1608 = vsel %vm862, %v1603, %v1607
          %v1613 = vunpack.c.l.b16 %v1585
          %v1614 = vunpack.c.l.b16 %v1586
          %v1615 = vunpack.c.l.b16 %v1587
          %v1616 = vunpack.c.l.b16 %v1588
          %v1617 = vpack.c.b16 %v1614, %v1613
          %v1618 = vpack.c.b16 %v1616, %v1615
          %v1622 = vsel %vm622, %v1608, 0
          %1624 = vmatpush.bf16.msra.mxu0 0
          %1625 = vmatpush.bf16.msra.mxu0 0
          %1626 = vmatpush.bf16.msra.mxu0 0
          %1627 = vmatpush.bf16.msra.mxu0 0
          %1628 = vmatpush.bf16.msra.mxu0 0
          %1629 = vmatpush.bf16.msra.mxu0 0
          %1630 = vmatpush.bf16.msra.mxu0 %v1618
          %1631 = vmatpush.bf16.msra.mxu0 %v1617
          %1632 = vmatmul.bf16.gmra.mxu0 %v1622
          %v1633 = vpop.f32.mrf.mxu0
          %v1634 = vadd.f32 0.0, %v1633
          %v1635 = vpop.f32.mrf.mxu0
          %v1636 = vadd.f32 0.0, %v1635
          %1637 = vdwg.mxu0
          %s1638 = scalar_lea.vmem [#allocation12], 128
          %v1639 = vld [vmem:[%s1638] sm:$0xf]
          %v1640 = vld [vmem:[%s1638 + $0x4] sm:$0xf]
          %v1641 = vld [vmem:[%s1638 + $0x8] sm:$0xf]
          %v1642 = vld [vmem:[%s1638 + $0xc] sm:$0xf]
          %v1647 = vunpack.c.l.b16 %v1639
          %v1648 = vunpack.c.l.b16 %v1640
          %v1649 = vunpack.c.l.b16 %v1641
          %v1650 = vunpack.c.l.b16 %v1642
          %v1651 = vpack.c.b16 %v1648, %v1647
          %v1652 = vpack.c.b16 %v1650, %v1649
          %1655 = vmatpush.bf16.msra.mxu0 0
          %1656 = vmatpush.bf16.msra.mxu0 0
          %1657 = vmatpush.bf16.msra.mxu0 0
          %1658 = vmatpush.bf16.msra.mxu0 0
          %1659 = vmatpush.bf16.msra.mxu0 0
          %1660 = vmatpush.bf16.msra.mxu0 0
          %1661 = vmatpush.bf16.msra.mxu0 %v1652
          %1662 = vmatpush.bf16.msra.mxu0 %v1651
          %1663 = vmatmul.bf16.gmra.mxu0 %v1622
          %v1664 = vpop.f32.mrf.mxu0
          %v1665 = vadd.f32 0.0, %v1664
          %v1666 = vpop.f32.mrf.mxu0
          %v1667 = vadd.f32 0.0, %v1666
          %1668 = vdwg.mxu0
          %v1669 = vadd.f32 %v1551, %v1634
          %v1670 = vadd.f32 %v1553, %v1636
          %v1671 = vadd.f32 %v1577, %v1665
          %v1672 = vadd.f32 %v1579, %v1667
          %s1673 = scalar_lea.vmem %s5, 2
          %v1674 = vld [vmem:[%s1673] sm:$0x1]
          %v1676 = vperm.slane %v1674, 0
          %v1678 = vadd.f32 %v1669, %v1676
          %v1679 = vadd.f32 %v1670, %v1676
          %s1680 = scalar_lea.vmem [#allocation13], 2
          %v1681 = vld [vmem:[%s1680] sm:$0x1]
          %v1683 = vperm.slane %v1681, 0
          %v1685 = vadd.f32 %v1671, %v1683
          %v1686 = vadd.f32 %v1672, %v1683
          %v1687 = vxor.u32 %v1685, 2147483648
          %v1688 = vxor.u32 %v1686, 2147483648
          %v1689 = vmul.f32 %v1687, 1.442695
          %v1690 = vpow.pop %v1689
          %v1691 = vmul.f32 %v1688, 1.442695
          %v1692 = vpow.pop %v1691
          %v1693 = vadd.f32 %v1690, 1.0
          %v1694 = vadd.f32 %v1692, 1.0
          %v1695 = vrcp.pop %v1693
          %v1696 = vmul.f32 %v1693, %v1695
          %v1697 = vsub.f32 1.0, %v1696
          %v1698 = vmul.f32 %v1695, %v1697
          %v1699 = vadd.f32 %v1695, %v1698
          %vm1700 = vweird.f32 %v1693
          %vm1701 = vweird.f32 %v1695
          %vm1702 = vmor %vm1700, %vm1701
          %v1703 = vsel %vm1702, %v1695, %v1699
          %v1704 = vand.u32 2147483647, %v1693
          %vm1705 = vcmp.eq.f32.partialorder %v1704, 8.507059e+37
          %v1706 = vand.u32 %v1693, 2147483648
          %v1707 = vor.u32 1.1754944e-38, %v1706
          %v1708 = vsel %vm1705, %v1707, %v1703
          %v1709 = vmul.f32 1.0, %v1708
          %v1710 = vrcp.pop %v1694
          %v1711 = vmul.f32 %v1694, %v1710
          %v1712 = vsub.f32 1.0, %v1711
          %v1713 = vmul.f32 %v1710, %v1712
          %v1714 = vadd.f32 %v1710, %v1713
          %vm1715 = vweird.f32 %v1694
          %vm1716 = vweird.f32 %v1710
          %vm1717 = vmor %vm1715, %vm1716
          %v1718 = vsel %vm1717, %v1710, %v1714
          %v1719 = vand.u32 2147483647, %v1694
          %vm1720 = vcmp.eq.f32.partialorder %v1719, 8.507059e+37
          %v1721 = vand.u32 %v1694, 2147483648
          %v1722 = vor.u32 1.1754944e-38, %v1721
          %v1723 = vsel %vm1720, %v1722, %v1718
          %v1724 = vmul.f32 1.0, %v1723
          %v1725 = vmul.f32 %v1678, %v1709
          %v1726 = vmul.f32 %v1679, %v1724
          %v1727 = vadd.f32 %v1725, %v1416
          %v1728 = vadd.f32 %v1726, %v1417
          %s1729 = scalar_lea.vmem %s7, 2
          %v1730 = vld [vmem:[%s1729] sm:$0x1]
          %s1731 = scalar_lea.vmem [#allocation15], 2
          %v1732 = vld [vmem:[%s1731] sm:$0x1]
          %v1733 = vsel %vm622, %v1727, 0.0
          %1734 = vadd.xlane.f32.xlu0 %v1733
          %v1735 = vpop.xlane.xlu0 %1734
          %v1736 = vsel %vm622, %v1728, 0.0
          %1737 = vadd.xlane.f32.xlu0 %v1736
          %v1738 = vpop.xlane.xlu0 %1737
          %v1739 = vmul.f32 %v1735, %v635
          %v1740 = vmul.f32 %v1738, %v635
          %v1741 = vsub.f32 %v1727, %v1739
          %v1742 = vsub.f32 %v1728, %v1740
          %v1743 = vmul.f32 %v1741, %v1741
          %v1744 = vmul.f32 %v1742, %v1742
          %v1745 = vsel %vm622, %v1743, 0.0
          %1746 = vadd.xlane.f32.xlu0 %v1745
          %v1747 = vpop.xlane.xlu0 %1746
          %v1748 = vsel %vm622, %v1744, 0.0
          %1749 = vadd.xlane.f32.xlu0 %v1748
          %v1750 = vpop.xlane.xlu0 %1749
          %v1751 = vmul.f32 %v1747, %v635
          %v1752 = vmul.f32 %v1750, %v635
          %v1753 = vadd.f32 %v1751, 1e-05
          %v1754 = vadd.f32 %v1752, 1e-05
          %v1755 = vrsqrt.pop %v1753
          %v1756 = vmul.f32 %v1755, %v1753
          %v1757 = vmul.f32 %v1756, %v1755
          %v1758 = vmul.f32 0.5, %v1757
          %v1759 = vsub.f32 1.5, %v1758
          %v1760 = vmul.f32 %v1755, %v1759
          %vm1761 = vweird.f32 %v1753
          %vm1762 = vweird.f32 %v1755
          %vm1763 = vmor %vm1761, %vm1762
          %v1764 = vsel %vm1763, %v1755, %v1760
          %v1765 = vrsqrt.pop %v1754
          %v1766 = vmul.f32 %v1765, %v1754
          %v1767 = vmul.f32 %v1766, %v1765
          %v1768 = vmul.f32 0.5, %v1767
          %v1769 = vsub.f32 1.5, %v1768
          %v1770 = vmul.f32 %v1765, %v1769
          %vm1771 = vweird.f32 %v1754
          %vm1772 = vweird.f32 %v1765
          %vm1773 = vmor %vm1771, %vm1772
          %v1774 = vsel %vm1773, %v1765, %v1770
          %v1775 = vmul.f32 %v1741, %v1764
          %v1776 = vmul.f32 %v1742, %v1774
          %v1778 = vperm.slane %v1730, 0
          %v1780 = vmul.f32 %v1775, %v1778
          %v1781 = vmul.f32 %v1776, %v1778
          %v1783 = vperm.slane %v1732, 0
          %v1785 = vadd.f32 %v1780, %v1783
          %v1786 = vadd.f32 %v1781, %v1783
          %v1787 = vld [vmem:[%s9] sm:$0x1]
          %v1788 = vld [vmem:[%s10] sm:$0x1]
          %v1789 = vsel %vm622, %v1785, 0.0
          %1790 = vadd.xlane.f32.xlu0 %v1789
          %v1791 = vpop.xlane.xlu0 %1790
          %v1792 = vsel %vm622, %v1786, 0.0
          %1793 = vadd.xlane.f32.xlu0 %v1792
          %v1794 = vpop.xlane.xlu0 %1793
          %v1795 = vmul.f32 %v1791, %v635
          %v1796 = vmul.f32 %v1794, %v635
          %v1797 = vsub.f32 %v1785, %v1795
          %v1798 = vsub.f32 %v1786, %v1796
          %v1799 = vmul.f32 %v1797, %v1797
          %v1800 = vmul.f32 %v1798, %v1798
          %v1801 = vsel %vm622, %v1799, 0.0
          %1802 = vadd.xlane.f32.xlu0 %v1801
          %v1803 = vpop.xlane.xlu0 %1802
          %v1804 = vsel %vm622, %v1800, 0.0
          %1805 = vadd.xlane.f32.xlu0 %v1804
          %v1806 = vpop.xlane.xlu0 %1805
          %v1807 = vmul.f32 %v1803, %v635
          %v1808 = vmul.f32 %v1806, %v635
          %v1809 = vadd.f32 %v1807, 1e-05
          %v1810 = vadd.f32 %v1808, 1e-05
          %v1811 = vrsqrt.pop %v1809
          %v1812 = vmul.f32 %v1811, %v1809
          %v1813 = vmul.f32 %v1812, %v1811
          %v1814 = vmul.f32 0.5, %v1813
          %v1815 = vsub.f32 1.5, %v1814
          %v1816 = vmul.f32 %v1811, %v1815
          %vm1817 = vweird.f32 %v1809
          %vm1818 = vweird.f32 %v1811
          %vm1819 = vmor %vm1817, %vm1818
          %v1820 = vsel %vm1819, %v1811, %v1816
          %v1821 = vrsqrt.pop %v1810
          %v1822 = vmul.f32 %v1821, %v1810
          %v1823 = vmul.f32 %v1822, %v1821
          %v1824 = vmul.f32 0.5, %v1823
          %v1825 = vsub.f32 1.5, %v1824
          %v1826 = vmul.f32 %v1821, %v1825
          %vm1827 = vweird.f32 %v1810
          %vm1828 = vweird.f32 %v1821
          %vm1829 = vmor %vm1827, %vm1828
          %v1830 = vsel %vm1829, %v1821, %v1826
          %v1831 = vmul.f32 %v1797, %v1820
          %v1832 = vmul.f32 %v1798, %v1830
          %v1834 = vperm.slane %v1787, 0
          %v1836 = vmul.f32 %v1831, %v1834
          %v1837 = vmul.f32 %v1832, %v1834
          %v1839 = vperm.slane %v1788, 0
          %v1841 = vadd.f32 %v1836, %v1839
          %v1842 = vadd.f32 %v1837, %v1839
          %v1843 = vpack.c.bf16 %v1841, %v1841
          %v1844 = vpack.c.bf16 %v1842, %v1842
          %1845 = vst.msk [vmem:[#allocation3] sm:$0xf] %vm613, %v1843
          %1846 = vst.msk [vmem:[#allocation3 + $0x4] sm:$0xf] %vm613, %v1844
        $region108: #{tpu_custom_call.1} parent=71 // pred_fallthru
          _
        %v1847 = vld [vmem:[#allocation3] sm:$0xf]
        %v1848 = vld [vmem:[#allocation3 + $0x4] sm:$0xf]
        %v1849 = vld [vmem:[#allocation16] sm:$0xf]
        %v1850 = vld [vmem:[#allocation16 + $0x4] sm:$0xf]
        %v1851 = vld [vmem:[#allocation16 + $0x8] sm:$0xf]
        %v1852 = vld [vmem:[#allocation16 + $0xc] sm:$0xf]
        %v1853 = vld [vmem:[%s607] sm:$0x1]
        %v1855 = vperm.slane %v1853, 0
        %v1859 = vunpack.c.l.b16 %v1847
        %v1860 = vunpack.c.l.b16 %v1848
        %v1861 = vpack.c.b16 %v1860, %v1859
        %v1866 = vunpack.c.l.b16 %v1849
        %v1867 = vunpack.c.l.b16 %v1850
        %v1868 = vunpack.c.l.b16 %v1851
        %v1869 = vunpack.c.l.b16 %v1852
        %v1870 = vpack.c.b16 %v1867, %v1866
        %v1871 = vpack.c.b16 %v1869, %v1868
        %vm1874 = vcmask 261120
        %v1876 = vsel %vm1874, %v1861, 0
        %1878 = vmatpush.bf16.msra.mxu0 0
        %1879 = vmatpush.bf16.msra.mxu0 0
        %1880 = vmatpush.bf16.msra.mxu0 0
        %1881 = vmatpush.bf16.msra.mxu0 0
        %1882 = vmatpush.bf16.msra.mxu0 0
        %1883 = vmatpush.bf16.msra.mxu0 0
        %1884 = vmatpush.bf16.msra.mxu0 %v1871
        %1885 = vmatpush.bf16.msra.mxu0 %v1870
        %1886 = vmatmul.bf16.gmra.mxu0 %v1876
        %v1887 = vpop.f32.mrf.mxu0
        %v1888 = vadd.f32 %v1855, %v1887
        %v1889 = vpop.f32.mrf.mxu0
        %v1890 = vadd.f32 %v1855, %v1889
        %1891 = vdwg.mxu0
        %1892 = vst [vmem:[%s604] sm:$0xff] %v1888
        %1893 = vst [vmem:[%s604 + $0x8] sm:$0xff] %v1890
        %s1894 = sand.u32 %s344, 1
        %s1895 = scalar_lea.sflag [#allocation6], %s1894
        %s1896 = sand.u32 %s344, 1
        %s1897 = smul.addr %s1896, 16
        %s1898 = scalar_lea.vmem [#allocation18], %s1897
        // Predicated region
        $region109: #{tpu_custom_call.1} parent=71 // pred_check
          %p1899 = pneg %p354
        $region110: #{tpu_custom_call.1} parent=71 // pred_check_branch
          %1901 = sbr.rel (%p1899) target = $region112
        $region111: #{tpu_custom_call.1} parent=71 // pred_region
          %1903 = vsyncadd %s1895, 0
          %s1904 = smul.addr %s38, 2
          %s1905 = sadd.s32 %s39, %s1904
          %s1906 = smul.addr %s1905, 8
          %s1907 = scalar_lea.hbm %s13, %s1906
          %s1908 = sshll.u32 %s1898, 4
          %s1909 = int_to_ptr.vmem [resolvable:$true] %s1908
          %s1910 = sshll.u32 %s1907, 4
          %s1911 = int_to_ptr.hbm [resolvable:$true] %s1910
          %1916 = dma.vmem_to_hbm [thread:$0]  %s1909, 256, %s1911, %s1895, 128, 128, 8
        $region112: #{tpu_custom_call.1} parent=71 // pred_fallthru
          _
      $region72: #{tpu_custom_call.1} parent=5 // pred_fallthru
        _
      %p1917 = scmp.le.s32.totalorder 2, %s29
      // Predicated region
      $region113: #{tpu_custom_call.1} parent=5 // pred_check
        %p1918 = pneg %p1917
      $region114: #{tpu_custom_call.1} parent=5 // pred_check_branch
        %1920 = sbr.rel (%p1918) target = $region116
      $region115: #{tpu_custom_call.1} parent=5 // pred_region
        %s1921 = ssub.s32 %s29, 2
        // Predicated region
        $region117: #{tpu_custom_call.1} parent=115 // pred_check
          %p1922 = pneg %p360
        $region118: #{tpu_custom_call.1} parent=115 // pred_check_branch
          %1924 = sbr.rel (%p1922) target = $region120
        $region119: #{tpu_custom_call.1} parent=115 // pred_region
          %s1925 = sand.u32 %s345, 1
          %s1926 = scalar_lea.sflag [#allocation6], %s1925
          %s1927 = sand.u32 %s345, 1
          %s1928 = smul.addr %s1927, 16
          %s1929 = scalar_lea.vmem [#allocation18], %s1928
          %1931 = dma.done %s1926, 256
        $region120: #{tpu_custom_call.1} parent=115 // pred_fallthru
          _
      $region116: #{tpu_custom_call.1} parent=5 // pred_fallthru
        _
    $region6: #{tpu_custom_call.1} parent=1 // loop_footer
      %s33 = sadd.s32 1, %s29
    $region7: #{tpu_custom_call.1} parent=1 // loop_footer_branch
      %28 = sbr.rel target = $region3
    $region8: #{tpu_custom_call.1} parent=1 // loop_exit
      _
    %1932 = vsyncpa [#allocation5], 1
    %s1933 = scalar_lea.sflag [#allocation5], 1
    %1934 = vsyncpa %s1933, 1
    %1935 = vsyncpa [#allocation8], 1
    %1936 = vsyncpa [#allocation11], 1
    %1937 = vsyncpa [#allocation14], 1
    %1938 = vsyncpa [#allocation17], 1
    %1939 = vsyncpa [#allocation6], 1
    %s1940 = scalar_lea.sflag [#allocation6], 1
    %1941 = vsyncpa %s1940, 1

</llo_original>
